<compile_context>
chip_gen: v6e
topology: v6e:2x2x1
jax: 0.10.0
libtpu: 0.0.40
codegen_flags: <defaults>
</compile_context>

<pallas_src>
import functools

import jax
import jax.numpy as jnp
import numpy as np
from jax.experimental import pallas as pl
from jax.experimental.pallas import tpu as pltpu


def _pick_head_group(num_heads, head_dim, max_group=4, target_lanes=128):
    """Smallest head group (dividing num_heads, <= max_group) reaching ~128 lanes."""
    best = 1
    for g in range(1, num_heads + 1):
        if g > max_group:
            break
        if num_heads % g:
            continue
        best = g
        if g * head_dim >= target_lanes:
            break
    return best


# ---------------------------------------------------------------------------
# Fused kernel: qkv projection + softmax(QK^T)@V + output projection.
# Grid = (B, num_head_groups); head-group axis accumulates into the output.
# ---------------------------------------------------------------------------
def _make_fused_attn_kernel(num_heads, group, head_dim, dim, compute_dtype):
    G, D, C = group, head_dim, dim
    GD = G * D
    HG = num_heads // G
    dn = (((1,), (1,)), ((), ()))          # contract last dims; rhs "transpose"
                                           # is absorbed by the MXU

    def kernel(x_ref, wqkv_ref, wproj_ref, bproj_ref, o_ref, attn_ref, acc_ref):
        # x_ref:    (1, N, C)   wqkv_ref: (3C, C) resident   wproj_ref: (C, C) resident
        # bproj_ref:(1, C) f32  o_ref: (1, N, C)  attn_ref: (1, G, N, N)
        # acc_ref:  (N, C) f32 scratch (output-projection accumulator over head groups)
        p = pl.program_id(1)

        @pl.when(p == 0)
        def _init():
            acc_ref[...] = jnp.zeros_like(acc_ref)

        x = x_ref[0].astype(compute_dtype)                       # (N, C)

        # Per-group q/k/v projections from dynamic SUBLANE row slices of the
        # resident (3C, C) weight (softmax scale already folded into q rows).
        q_off = pl.multiple_of(p * GD, GD)
        k_off = pl.multiple_of(p * GD + C, GD)
        v_off = pl.multiple_of(p * GD + 2 * C, GD)
        wq = wqkv_ref[pl.ds(q_off, GD), :]                       # (GD, C)
        wk = wqkv_ref[pl.ds(k_off, GD), :]
        wv = wqkv_ref[pl.ds(v_off, GD), :]
        q = jax.lax.dot_general(x, wq, dn, preferred_element_type=jnp.float32
                                ).astype(compute_dtype)          # (N, GD)
        k = jax.lax.dot_general(x, wk, dn, preferred_element_type=jnp.float32
                                ).astype(compute_dtype)
        v = jax.lax.dot_general(x, wv, dn, preferred_element_type=jnp.float32
                                ).astype(compute_dtype)

        # Per-head attention within the group (small static unroll, G <= 4).
        ctx_parts = []
        for g in range(G):
            sl = slice(g * D, (g + 1) * D)
            s = jax.lax.dot_general(q[:, sl], k[:, sl], dn,
                                    preferred_element_type=jnp.float32)  # (N, N) f32
            s = s - jnp.max(s, axis=-1, keepdims=True)
            e = jnp.exp(s)
            denom = jnp.sum(e, axis=-1, keepdims=True)
            probs = e * pl.reciprocal(denom, approx=True)        # EUP, ~free
            attn_ref[0, g] = probs.astype(attn_ref.dtype)        # lane-dense (N, N)
            ctx_parts.append(jnp.dot(probs.astype(compute_dtype), v[:, sl],
                                     preferred_element_type=jnp.float32))  # (N, D)
        ctx = jnp.concatenate(ctx_parts, axis=-1).astype(compute_dtype)     # (N, GD)

        # Fused output projection: accumulate this group's contribution.
        wp = wproj_ref[pl.ds(q_off, GD), :]                      # (GD, C) rows of W_proj^T
        acc_ref[...] += jnp.dot(ctx, wp, preferred_element_type=jnp.float32)

        @pl.when(p == HG - 1)
        def _finalize():
            o_ref[0] = (acc_ref[...] + bproj_ref[...]).astype(o_ref.dtype)

    return kernel


# ---------------------------------------------------------------------------
# Full Attention forward (mirrors the PyTorch module: returns (x, attn))
# ---------------------------------------------------------------------------
def attention_forward(x, params, num_heads, compute_dtype=jnp.bfloat16,
                      attn_dtype=None):
    B, N, C = x.shape
    assert C % num_heads == 0
    D = C // num_heads
    scale = D ** (-0.5)                                          # qk_scale=None default
    attn_dtype = x.dtype if attn_dtype is None else attn_dtype   # pass bf16 to halve
                                                                 # the attn writeback
    G = _pick_head_group(num_heads, D)
    HG = num_heads // G

    # One-time weight prep (XLA ops, tiny vs. activation traffic):
    #   - fold the softmax scale into the q rows of the (3C, C) nn.Linear weight
    #   - transpose the proj weight once so the kernel does ctx @ W_proj^T rows
    w_qkv = params["w_qkv"].at[:C].multiply(scale).astype(compute_dtype)   # (3C, C)
    w_proj_t = params["w_proj"].T.astype(compute_dtype)                    # (C, C)
    b_proj = params["b_proj"].astype(jnp.float32).reshape(1, C)
    # TODO(synk): the module default qkv_bias=False is assumed; add a bias add on
    # q/k/v here if a qkv_bias=True variant of the module is needed.

    kernel = _make_fused_attn_kernel(num_heads, G, D, C, compute_dtype)

    flops = (2 * B * N * C * (3 * C)                    # qkv projection
             + 4 * B * num_heads * N * N * D            # QK^T and P@V
             + 2 * B * N * C * C)                       # output projection
    transcendentals = B * num_heads * N * N             # exp
    bytes_accessed = (x.size * x.dtype.itemsize
                      + (w_qkv.size + w_proj_t.size) * np.dtype(compute_dtype).itemsize
                      + b_proj.size * 4
                      + B * num_heads * N * N * np.dtype(attn_dtype).itemsize
                      + B * N * C * x.dtype.itemsize)

    # TODO(synk): for long sequences where the caller discards `attn`, switch to a
    # KV-tiled online-softmax (flash) variant and skip the (B,H,N,N) output.
    # TODO(synk): mark the two resident weight BlockSpecs single-buffered
    # (pipeline_mode=pl.Buffered(1)) once confirmed on the target jax version;
    # saves ~half their VMEM footprint on v7x.
    out, attn = pl.pallas_call(
        kernel,
        out_shape=(
            jax.ShapeDtypeStruct((B, N, C), x.dtype),
            jax.ShapeDtypeStruct((B, num_heads, N, N), attn_dtype),
        ),
        grid_spec=pltpu.PrefetchScalarGridSpec(
            num_scalar_prefetch=0,
            grid=(B, HG),
            in_specs=[
                pl.BlockSpec((1, N, C), lambda b, p: (b, 0, 0)),      # x (per batch)
                pl.BlockSpec((3 * C, C), lambda b, p: (0, 0)),        # qkv weight, resident
                pl.BlockSpec((C, C), lambda b, p: (0, 0)),            # proj weight^T, resident
                pl.BlockSpec((1, C), lambda b, p: (0, 0)),            # proj bias, resident
            ],
            out_specs=[
                pl.BlockSpec((1, N, C), lambda b, p: (b, 0, 0)),      # out (accumulated over p)
                pl.BlockSpec((1, G, N, N), lambda b, p: (b, p, 0, 0)),  # attn, per head group
            ],
            scratch_shapes=[pltpu.VMEM((N, C), jnp.float32)],
        ),
        compiler_params=pltpu.CompilerParams(
            dimension_semantics=("parallel", "arbitrary"),
            vmem_limit_bytes=64 * 1024 * 1024,
        ),
        cost_estimate=pl.CostEstimate(
            flops=flops,
            transcendentals=transcendentals,
            bytes_accessed=bytes_accessed,
        ),
    )(x, w_qkv, w_proj_t, b_proj)
    # attn_drop / proj_drop are identity at p=0.0 (module defaults).
    return out, attn


def init_params(key, dim):
    """Deterministic parameter init matching nn.Linear shapes (out, in)."""
    k1, k2, k3 = jax.random.split(key, 3)
    bound = 1.0 / (dim ** 0.5)
    w_qkv = jax.random.uniform(k1, (3 * dim, dim), jnp.float32, -bound, bound)
    w_proj = jax.random.uniform(k2, (dim, dim), jnp.float32, -bound, bound)
    b_proj = jax.random.uniform(k3, (dim,), jnp.float32, -bound, bound)
    return {"w_qkv": w_qkv, "w_proj": w_proj, "b_proj": b_proj}


def ref_forward(x, params, num_heads, compute_dtype=jnp.bfloat16):
    """Pure-JAX reference of the same math (bf16 MXU operands, f32 accumulation)."""
    B, N, C = x.shape
    D = C // num_heads
    scale = D ** (-0.5)
    cdt = compute_dtype
    w_qkv = params["w_qkv"].at[:C].multiply(scale).astype(cdt)            # (3C, C)
    qkv = jax.lax.dot_general(x.astype(cdt), w_qkv, (((2,), (1,)), ((), ())),
                              preferred_element_type=jnp.float32).astype(cdt)
    qkv = qkv.reshape(B, N, 3, num_heads, D).transpose(2, 0, 3, 1, 4)
    q, k, v = qkv[0], qkv[1], qkv[2]
    s = jnp.einsum("bhqd,bhkd->bhqk", q, k, preferred_element_type=jnp.float32)
    a = jax.nn.softmax(s, axis=-1)
    ctx = jnp.einsum("bhqk,bhkd->bhqd", a.astype(cdt), v,
                     preferred_element_type=jnp.float32)
    ctx = ctx.transpose(0, 2, 1, 3).reshape(B, N, C).astype(cdt)
    out = jnp.dot(ctx, params["w_proj"].T.astype(cdt),
                  preferred_element_type=jnp.float32) + params["b_proj"]
    return out.astype(x.dtype), a.astype(x.dtype)


if __name__ == "__main__":
    B, N, C, H = 2, 16, 64, 8        # head_dim = 8 -> head group 4, 2 groups/batch

    key = jax.random.PRNGKey(0)
    kx, kp = jax.random.split(key)
    x = jax.random.normal(kx, (B, N, C), dtype=jnp.float32)
    params = init_params(kp, C)

    fwd = jax.jit(functools.partial(attention_forward, num_heads=H))
    out, attn = fwd(x, params)
    jax.block_until_ready((out, attn))

    out_ref, attn_ref = ref_forward(x, params, H)
    assert out.shape == (B, N, C) and attn.shape == (B, H, N, N)
    assert jnp.allclose(out, out_ref, atol=2e-2, rtol=2e-2), \
        float(jnp.max(jnp.abs(out - out_ref)))
    assert jnp.allclose(attn, attn_ref, atol=2e-2, rtol=2e-2), \
        float(jnp.max(jnp.abs(attn - attn_ref)))

    print("KERNEL_OK")
</pallas_src>

<mosaic_0001>
module attributes {stable_mosaic.version = 11 : i64} {
  func.func @kernel(%arg0: i32, %arg1: i32, %arg2: memref<1x16x64xf32, #tpu.memory_space<vmem>>, %arg3: memref<192x64xbf16, #tpu.memory_space<vmem>>, %arg4: memref<64x64xbf16, #tpu.memory_space<vmem>>, %arg5: memref<1x64xf32, #tpu.memory_space<vmem>>, %arg6: memref<1x16x64xf32, #tpu.memory_space<vmem>>, %arg7: memref<1x4x16x16xf32, #tpu.memory_space<vmem>>, %arg8: memref<16x64xf32, #tpu.memory_space<vmem>>) attributes {dimension_semantics = [#tpu.dimension_semantics<parallel>, #tpu.dimension_semantics<arbitrary>], iteration_bounds = array<i64: 2, 2>, scalar_prefetch = 0 : i64, scratch_operands = 1 : i64, tpu.core_type = #tpu.core_type<tc>, window_params = [{transform_indices = @transform_0, window_bounds = array<i64: 1, 16, 64>}, {pipeline_mode = #tpu.pipeline_mode<synchronous>, transform_indices = @transform_1, window_bounds = array<i64: 192, 64>}, {pipeline_mode = #tpu.pipeline_mode<synchronous>, transform_indices = @transform_2, window_bounds = array<i64: 64, 64>}, {pipeline_mode = #tpu.pipeline_mode<synchronous>, transform_indices = @transform_3, window_bounds = array<i64: 1, 64>}, {transform_indices = @transform_4, window_bounds = array<i64: 1, 16, 64>}, {transform_indices = @transform_5, window_bounds = array<i64: 1, 4, 16, 16>}]} {
    %c0_i32 = arith.constant 0 : i32
    %0 = arith.cmpi eq, %arg1, %c0_i32 : i32
    %1 = arith.extui %0 : i1 to i32
    %c0_i32_0 = arith.constant 0 : i32
    %2 = arith.cmpi ne, %1, %c0_i32_0 : i32
    scf.if %2 {
      %cst_46 = arith.constant 0.000000e+00 : f32
      %113 = vector.broadcast %cst_46 : f32 to vector<16x64xf32>
      %c0_47 = arith.constant 0 : index
      %c0_48 = arith.constant 0 : index
      %114 = vector.load %arg8[%c0_47, %c0_48] : memref<16x64xf32, #tpu.memory_space<vmem>>, vector<16x64xf32>
      tpu.vector_store %arg8[%c0_47, %c0_48], %113 {strides = array<i32>} : memref<16x64xf32, #tpu.memory_space<vmem>>, vector<16x64xf32>,
    } else {
    }
    %c0 = arith.constant 0 : index
    %c0_1 = arith.constant 0 : index
    %c0_2 = arith.constant 0 : index
    %3 = vector.load %arg2[%c0, %c0_1, %c0_2] : memref<1x16x64xf32, #tpu.memory_space<vmem>>, vector<1x16x64xf32>
    %4 = vector.shape_cast %3 : vector<1x16x64xf32> to vector<16x64xf32>
    %5 = arith.truncf %4 : vector<16x64xf32> to vector<16x64xbf16>
    %c32_i32 = arith.constant 32 : i32
    %6 = arith.muli %arg1, %c32_i32 : i32
    %7 = tpu.assume_multiple %6, 32 : i32
    %c32_i32_3 = arith.constant 32 : i32
    %8 = arith.muli %arg1, %c32_i32_3 : i32
    %c64_i32 = arith.constant 64 : i32
    %9 = arith.addi %8, %c64_i32 : i32
    %10 = tpu.assume_multiple %9, 32 : i32
    %c32_i32_4 = arith.constant 32 : i32
    %11 = arith.muli %arg1, %c32_i32_4 : i32
    %c128_i32 = arith.constant 128 : i32
    %12 = arith.addi %11, %c128_i32 : i32
    %13 = tpu.assume_multiple %12, 32 : i32
    %14 = arith.index_cast %7 : i32 to index
    %c0_5 = arith.constant 0 : index
    %15 = vector.load %arg3[%14, %c0_5] : memref<192x64xbf16, #tpu.memory_space<vmem>>, vector<32x64xbf16>
    %16 = arith.index_cast %10 : i32 to index
    %c0_6 = arith.constant 0 : index
    %17 = vector.load %arg3[%16, %c0_6] : memref<192x64xbf16, #tpu.memory_space<vmem>>, vector<32x64xbf16>
    %18 = arith.index_cast %13 : i32 to index
    %c0_7 = arith.constant 0 : index
    %19 = vector.load %arg3[%18, %c0_7] : memref<192x64xbf16, #tpu.memory_space<vmem>>, vector<32x64xbf16>
    %cst = arith.constant dense<0.000000e+00> : vector<16x32xf32>
    %20 = tpu.matmul %5, %15, %cst {dimension_numbers = #tpu.dot_dimension_numbers<[1], [1], [0], [0], [0, 0, 1, 0], [], []>} : vector<16x64xbf16>, vector<32x64xbf16>, vector<16x32xf32> -> vector<16x32xf32>
    %21 = arith.truncf %20 : vector<16x32xf32> to vector<16x32xbf16>
    %cst_8 = arith.constant dense<0.000000e+00> : vector<16x32xf32>
    %22 = tpu.matmul %5, %17, %cst_8 {dimension_numbers = #tpu.dot_dimension_numbers<[1], [1], [0], [0], [0, 0, 1, 0], [], []>} : vector<16x64xbf16>, vector<32x64xbf16>, vector<16x32xf32> -> vector<16x32xf32>
    %23 = arith.truncf %22 : vector<16x32xf32> to vector<16x32xbf16>
    %cst_9 = arith.constant dense<0.000000e+00> : vector<16x32xf32>
    %24 = tpu.matmul %5, %19, %cst_9 {dimension_numbers = #tpu.dot_dimension_numbers<[1], [1], [0], [0], [0, 0, 1, 0], [], []>} : vector<16x64xbf16>, vector<32x64xbf16>, vector<16x32xf32> -> vector<16x32xf32>
    %25 = arith.truncf %24 : vector<16x32xf32> to vector<16x32xbf16>
    %26 = vector.extract_strided_slice %21 {offsets = [0, 0], sizes = [16, 8], strides = [1, 1]} : vector<16x32xbf16> to vector<16x8xbf16>
    %27 = vector.extract_strided_slice %23 {offsets = [0, 0], sizes = [16, 8], strides = [1, 1]} : vector<16x32xbf16> to vector<16x8xbf16>
    %cst_10 = arith.constant dense<0.000000e+00> : vector<16x16xf32>
    %28 = tpu.matmul %26, %27, %cst_10 {dimension_numbers = #tpu.dot_dimension_numbers<[1], [1], [0], [0], [0, 0, 1, 0], [], []>} : vector<16x8xbf16>, vector<16x8xbf16>, vector<16x16xf32> -> vector<16x16xf32>
    %cst_11 = arith.constant dense<0xFF800000> : vector<16xf32>
    %29 = vector.multi_reduction <maximumf>, %28, %cst_11 [1] : vector<16x16xf32> to vector<16xf32>
    %30 = vector.shape_cast %29 : vector<16xf32> to vector<16x1xf32>
    %31 = vector.broadcast %30 : vector<16x1xf32> to vector<16x16xf32>
    %32 = arith.subf %28, %31 : vector<16x16xf32>
    %33 = math.exp %32 : vector<16x16xf32>
    %cst_12 = arith.constant dense<0.000000e+00> : vector<16xf32>
    %34 = vector.multi_reduction <add>, %33, %cst_12 [1] : vector<16x16xf32> to vector<16xf32>
    %35 = vector.shape_cast %34 : vector<16xf32> to vector<16x1xf32>
    %36 = tpu.reciprocal %35 {approx = true} : vector<16x1xf32> -> vector<16x1xf32>
    %37 = vector.broadcast %36 : vector<16x1xf32> to vector<16x16xf32>
    %38 = arith.mulf %33, %37 : vector<16x16xf32>
    %c0_13 = arith.constant 0 : index
    %c0_14 = arith.constant 0 : index
    %c0_15 = arith.constant 0 : index
    %c0_16 = arith.constant 0 : index
    %39 = vector.load %arg7[%c0_13, %c0_14, %c0_15, %c0_16] : memref<1x4x16x16xf32, #tpu.memory_space<vmem>>, vector<1x1x16x16xf32>
    %40 = vector.shape_cast %39 : vector<1x1x16x16xf32> to vector<16x16xf32>
    %41 = vector.shape_cast %38 : vector<16x16xf32> to vector<1x1x16x16xf32>
    tpu.vector_store %arg7[%c0_13, %c0_14, %c0_15, %c0_16], %41 {strides = array<i32>} : memref<1x4x16x16xf32, #tpu.memory_space<vmem>>, vector<1x1x16x16xf32>,
    %42 = arith.truncf %38 : vector<16x16xf32> to vector<16x16xbf16>
    %43 = vector.extract_strided_slice %25 {offsets = [0, 0], sizes = [16, 8], strides = [1, 1]} : vector<16x32xbf16> to vector<16x8xbf16>
    %cst_17 = arith.constant dense<0.000000e+00> : vector<16x8xf32>
    %44 = tpu.matmul %42, %43, %cst_17 {dimension_numbers = #tpu.dot_dimension_numbers<[1], [0], [0], [1], [0, 0, 1, 1], [], []>} : vector<16x16xbf16>, vector<16x8xbf16>, vector<16x8xf32> -> vector<16x8xf32>
    %45 = vector.extract_strided_slice %21 {offsets = [0, 8], sizes = [16, 8], strides = [1, 1]} : vector<16x32xbf16> to vector<16x8xbf16>
    %46 = vector.extract_strided_slice %23 {offsets = [0, 8], sizes = [16, 8], strides = [1, 1]} : vector<16x32xbf16> to vector<16x8xbf16>
    %cst_18 = arith.constant dense<0.000000e+00> : vector<16x16xf32>
    %47 = tpu.matmul %45, %46, %cst_18 {dimension_numbers = #tpu.dot_dimension_numbers<[1], [1], [0], [0], [0, 0, 1, 0], [], []>} : vector<16x8xbf16>, vector<16x8xbf16>, vector<16x16xf32> -> vector<16x16xf32>
    %cst_19 = arith.constant dense<0xFF800000> : vector<16xf32>
    %48 = vector.multi_reduction <maximumf>, %47, %cst_19 [1] : vector<16x16xf32> to vector<16xf32>
    %49 = vector.shape_cast %48 : vector<16xf32> to vector<16x1xf32>
    %50 = vector.broadcast %49 : vector<16x1xf32> to vector<16x16xf32>
    %51 = arith.subf %47, %50 : vector<16x16xf32>
    %52 = math.exp %51 : vector<16x16xf32>
    %cst_20 = arith.constant dense<0.000000e+00> : vector<16xf32>
    %53 = vector.multi_reduction <add>, %52, %cst_20 [1] : vector<16x16xf32> to vector<16xf32>
    %54 = vector.shape_cast %53 : vector<16xf32> to vector<16x1xf32>
    %55 = tpu.reciprocal %54 {approx = true} : vector<16x1xf32> -> vector<16x1xf32>
    %56 = vector.broadcast %55 : vector<16x1xf32> to vector<16x16xf32>
    %57 = arith.mulf %52, %56 : vector<16x16xf32>
    %c0_21 = arith.constant 0 : index
    %c1 = arith.constant 1 : index
    %c0_22 = arith.constant 0 : index
    %c0_23 = arith.constant 0 : index
    %58 = vector.load %arg7[%c0_21, %c1, %c0_22, %c0_23] : memref<1x4x16x16xf32, #tpu.memory_space<vmem>>, vector<1x1x16x16xf32>
    %59 = vector.shape_cast %58 : vector<1x1x16x16xf32> to vector<16x16xf32>
    %60 = vector.shape_cast %57 : vector<16x16xf32> to vector<1x1x16x16xf32>
    tpu.vector_store %arg7[%c0_21, %c1, %c0_22, %c0_23], %60 {strides = array<i32>} : memref<1x4x16x16xf32, #tpu.memory_space<vmem>>, vector<1x1x16x16xf32>,
    %61 = arith.truncf %57 : vector<16x16xf32> to vector<16x16xbf16>
    %62 = vector.extract_strided_slice %25 {offsets = [0, 8], sizes = [16, 8], strides = [1, 1]} : vector<16x32xbf16> to vector<16x8xbf16>
    %cst_24 = arith.constant dense<0.000000e+00> : vector<16x8xf32>
    %63 = tpu.matmul %61, %62, %cst_24 {dimension_numbers = #tpu.dot_dimension_numbers<[1], [0], [0], [1], [0, 0, 1, 1], [], []>} : vector<16x16xbf16>, vector<16x8xbf16>, vector<16x8xf32> -> vector<16x8xf32>
    %64 = vector.extract_strided_slice %21 {offsets = [0, 16], sizes = [16, 8], strides = [1, 1]} : vector<16x32xbf16> to vector<16x8xbf16>
    %65 = vector.extract_strided_slice %23 {offsets = [0, 16], sizes = [16, 8], strides = [1, 1]} : vector<16x32xbf16> to vector<16x8xbf16>
    %cst_25 = arith.constant dense<0.000000e+00> : vector<16x16xf32>
    %66 = tpu.matmul %64, %65, %cst_25 {dimension_numbers = #tpu.dot_dimension_numbers<[1], [1], [0], [0], [0, 0, 1, 0], [], []>} : vector<16x8xbf16>, vector<16x8xbf16>, vector<16x16xf32> -> vector<16x16xf32>
    %cst_26 = arith.constant dense<0xFF800000> : vector<16xf32>
    %67 = vector.multi_reduction <maximumf>, %66, %cst_26 [1] : vector<16x16xf32> to vector<16xf32>
    %68 = vector.shape_cast %67 : vector<16xf32> to vector<16x1xf32>
    %69 = vector.broadcast %68 : vector<16x1xf32> to vector<16x16xf32>
    %70 = arith.subf %66, %69 : vector<16x16xf32>
    %71 = math.exp %70 : vector<16x16xf32>
    %cst_27 = arith.constant dense<0.000000e+00> : vector<16xf32>
    %72 = vector.multi_reduction <add>, %71, %cst_27 [1] : vector<16x16xf32> to vector<16xf32>
    %73 = vector.shape_cast %72 : vector<16xf32> to vector<16x1xf32>
    %74 = tpu.reciprocal %73 {approx = true} : vector<16x1xf32> -> vector<16x1xf32>
    %75 = vector.broadcast %74 : vector<16x1xf32> to vector<16x16xf32>
    %76 = arith.mulf %71, %75 : vector<16x16xf32>
    %c0_28 = arith.constant 0 : index
    %c2 = arith.constant 2 : index
    %c0_29 = arith.constant 0 : index
    %c0_30 = arith.constant 0 : index
    %77 = vector.load %arg7[%c0_28, %c2, %c0_29, %c0_30] : memref<1x4x16x16xf32, #tpu.memory_space<vmem>>, vector<1x1x16x16xf32>
    %78 = vector.shape_cast %77 : vector<1x1x16x16xf32> to vector<16x16xf32>
    %79 = vector.shape_cast %76 : vector<16x16xf32> to vector<1x1x16x16xf32>
    tpu.vector_store %arg7[%c0_28, %c2, %c0_29, %c0_30], %79 {strides = array<i32>} : memref<1x4x16x16xf32, #tpu.memory_space<vmem>>, vector<1x1x16x16xf32>,
    %80 = arith.truncf %76 : vector<16x16xf32> to vector<16x16xbf16>
    %81 = vector.extract_strided_slice %25 {offsets = [0, 16], sizes = [16, 8], strides = [1, 1]} : vector<16x32xbf16> to vector<16x8xbf16>
    %cst_31 = arith.constant dense<0.000000e+00> : vector<16x8xf32>
    %82 = tpu.matmul %80, %81, %cst_31 {dimension_numbers = #tpu.dot_dimension_numbers<[1], [0], [0], [1], [0, 0, 1, 1], [], []>} : vector<16x16xbf16>, vector<16x8xbf16>, vector<16x8xf32> -> vector<16x8xf32>
    %83 = vector.extract_strided_slice %21 {offsets = [0, 24], sizes = [16, 8], strides = [1, 1]} : vector<16x32xbf16> to vector<16x8xbf16>
    %84 = vector.extract_strided_slice %23 {offsets = [0, 24], sizes = [16, 8], strides = [1, 1]} : vector<16x32xbf16> to vector<16x8xbf16>
    %cst_32 = arith.constant dense<0.000000e+00> : vector<16x16xf32>
    %85 = tpu.matmul %83, %84, %cst_32 {dimension_numbers = #tpu.dot_dimension_numbers<[1], [1], [0], [0], [0, 0, 1, 0], [], []>} : vector<16x8xbf16>, vector<16x8xbf16>, vector<16x16xf32> -> vector<16x16xf32>
    %cst_33 = arith.constant dense<0xFF800000> : vector<16xf32>
    %86 = vector.multi_reduction <maximumf>, %85, %cst_33 [1] : vector<16x16xf32> to vector<16xf32>
    %87 = vector.shape_cast %86 : vector<16xf32> to vector<16x1xf32>
    %88 = vector.broadcast %87 : vector<16x1xf32> to vector<16x16xf32>
    %89 = arith.subf %85, %88 : vector<16x16xf32>
    %90 = math.exp %89 : vector<16x16xf32>
    %cst_34 = arith.constant dense<0.000000e+00> : vector<16xf32>
    %91 = vector.multi_reduction <add>, %90, %cst_34 [1] : vector<16x16xf32> to vector<16xf32>
    %92 = vector.shape_cast %91 : vector<16xf32> to vector<16x1xf32>
    %93 = tpu.reciprocal %92 {approx = true} : vector<16x1xf32> -> vector<16x1xf32>
    %94 = vector.broadcast %93 : vector<16x1xf32> to vector<16x16xf32>
    %95 = arith.mulf %90, %94 : vector<16x16xf32>
    %c0_35 = arith.constant 0 : index
    %c3 = arith.constant 3 : index
    %c0_36 = arith.constant 0 : index
    %c0_37 = arith.constant 0 : index
    %96 = vector.load %arg7[%c0_35, %c3, %c0_36, %c0_37] : memref<1x4x16x16xf32, #tpu.memory_space<vmem>>, vector<1x1x16x16xf32>
    %97 = vector.shape_cast %96 : vector<1x1x16x16xf32> to vector<16x16xf32>
    %98 = vector.shape_cast %95 : vector<16x16xf32> to vector<1x1x16x16xf32>
    tpu.vector_store %arg7[%c0_35, %c3, %c0_36, %c0_37], %98 {strides = array<i32>} : memref<1x4x16x16xf32, #tpu.memory_space<vmem>>, vector<1x1x16x16xf32>,
    %99 = arith.truncf %95 : vector<16x16xf32> to vector<16x16xbf16>
    %100 = vector.extract_strided_slice %25 {offsets = [0, 24], sizes = [16, 8], strides = [1, 1]} : vector<16x32xbf16> to vector<16x8xbf16>
    %cst_38 = arith.constant dense<0.000000e+00> : vector<16x8xf32>
    %101 = tpu.matmul %99, %100, %cst_38 {dimension_numbers = #tpu.dot_dimension_numbers<[1], [0], [0], [1], [0, 0, 1, 1], [], []>} : vector<16x16xbf16>, vector<16x8xbf16>, vector<16x8xf32> -> vector<16x8xf32>
    %102 = tpu.concatenate %44, %63, %82, %101 in 1 : vector<16x8xf32>, vector<16x8xf32>, vector<16x8xf32>, vector<16x8xf32> -> vector<16x32xf32>
    %103 = arith.truncf %102 : vector<16x32xf32> to vector<16x32xbf16>
    %104 = arith.index_cast %7 : i32 to index
    %c0_39 = arith.constant 0 : index
    %105 = vector.load %arg4[%104, %c0_39] : memref<64x64xbf16, #tpu.memory_space<vmem>>, vector<32x64xbf16>
    %c0_40 = arith.constant 0 : index
    %c0_41 = arith.constant 0 : index
    %106 = vector.load %arg8[%c0_40, %c0_41] : memref<16x64xf32, #tpu.memory_space<vmem>>, vector<16x64xf32>
    %cst_42 = arith.constant dense<0.000000e+00> : vector<16x64xf32>
    %107 = tpu.matmul %103, %105, %cst_42 {dimension_numbers = #tpu.dot_dimension_numbers<[1], [0], [0], [1], [0, 0, 1, 1], [], []>} : vector<16x32xbf16>, vector<32x64xbf16>, vector<16x64xf32> -> vector<16x64xf32>
    %108 = arith.addf %106, %107 : vector<16x64xf32>
    %c0_43 = arith.constant 0 : index
    %c0_44 = arith.constant 0 : index
    %109 = vector.load %arg8[%c0_43, %c0_44] : memref<16x64xf32, #tpu.memory_space<vmem>>, vector<16x64xf32>
    tpu.vector_store %arg8[%c0_43, %c0_44], %108 {strides = array<i32>} : memref<16x64xf32, #tpu.memory_space<vmem>>, vector<16x64xf32>,
    %c1_i32 = arith.constant 1 : i32
    %110 = arith.cmpi eq, %arg1, %c1_i32 : i32
    %111 = arith.extui %110 : i1 to i32
    %c0_i32_45 = arith.constant 0 : i32
    %112 = arith.cmpi ne, %111, %c0_i32_45 : i32
    scf.if %112 {
      %c0_46 = arith.constant 0 : index
      %c0_47 = arith.constant 0 : index
      %113 = vector.load %arg8[%c0_46, %c0_47] : memref<16x64xf32, #tpu.memory_space<vmem>>, vector<16x64xf32>
      %c0_48 = arith.constant 0 : index
      %c0_49 = arith.constant 0 : index
      %114 = vector.load %arg5[%c0_48, %c0_49] : memref<1x64xf32, #tpu.memory_space<vmem>>, vector<1x64xf32>
      %115 = vector.broadcast %114 : vector<1x64xf32> to vector<16x64xf32>
      %116 = arith.addf %113, %115 : vector<16x64xf32>
      %c0_50 = arith.constant 0 : index
      %c0_51 = arith.constant 0 : index
      %c0_52 = arith.constant 0 : index
      %117 = vector.load %arg6[%c0_50, %c0_51, %c0_52] : memref<1x16x64xf32, #tpu.memory_space<vmem>>, vector<1x16x64xf32>
      %118 = vector.shape_cast %117 : vector<1x16x64xf32> to vector<16x64xf32>
      %119 = vector.shape_cast %116 : vector<16x64xf32> to vector<1x16x64xf32>
      tpu.vector_store %arg6[%c0_50, %c0_51, %c0_52], %119 {strides = array<i32>} : memref<1x16x64xf32, #tpu.memory_space<vmem>>, vector<1x16x64xf32>,
    } else {
    }
    return
  }
  func.func @transform_0(%arg0: i32, %arg1: i32) -> (i32, i32, i32) {
    %c0_i32 = arith.constant 0 : i32
    %c0_i32_0 = arith.constant 0 : i32
    %c0_i32_1 = arith.constant 0 : i32
    return %arg0, %c0_i32, %c0_i32_0 : i32, i32, i32
  }
  func.func @transform_1(%arg0: i32, %arg1: i32) -> (i32, i32) {
    %c0_i32 = arith.constant 0 : i32
    %c0_i32_0 = arith.constant 0 : i32
    %c0_i32_1 = arith.constant 0 : i32
    return %c0_i32, %c0_i32_0 : i32, i32
  }
  func.func @transform_2(%arg0: i32, %arg1: i32) -> (i32, i32) {
    %c0_i32 = arith.constant 0 : i32
    %c0_i32_0 = arith.constant 0 : i32
    %c0_i32_1 = arith.constant 0 : i32
    return %c0_i32, %c0_i32_0 : i32, i32
  }
  func.func @transform_3(%arg0: i32, %arg1: i32) -> (i32, i32) {
    %c0_i32 = arith.constant 0 : i32
    %c0_i32_0 = arith.constant 0 : i32
    %c0_i32_1 = arith.constant 0 : i32
    return %c0_i32, %c0_i32_0 : i32, i32
  }
  func.func @transform_4(%arg0: i32, %arg1: i32) -> (i32, i32, i32) {
    %c0_i32 = arith.constant 0 : i32
    %c0_i32_0 = arith.constant 0 : i32
    %c0_i32_1 = arith.constant 0 : i32
    return %arg0, %c0_i32, %c0_i32_0 : i32, i32, i32
  }
  func.func @transform_5(%arg0: i32, %arg1: i32) -> (i32, i32, i32, i32) {
    %c0_i32 = arith.constant 0 : i32
    %c0_i32_0 = arith.constant 0 : i32
    %c0_i32_1 = arith.constant 0 : i32
    return %arg0, %arg1, %c0_i32, %c0_i32_0 : i32, i32, i32, i32
  }
}

</mosaic_0001>

<llo_original>
// kernel: attention_forward.1
$region0: #{attention_forward.1}
  #allocation0 [shape = 'u32[]', space=smem, size = 0x4, offset = 0x4, fixed_abs, tag = 'smem constant byte address 0x4 - core index']
  #allocation1 [shape = 'u32[144,128]{1,0:T(1,128)}', space=vmem, size = 0x12000, scoped, tag = 'internal scratch']
  #allocation2 [shape = 'f32[16,64]{1,0:T(8,128)}', space=vmem, size = 0x2000, scoped, tag = 'scratch operand']
  %s0 = inlined_call_operand.vmem [shape: f32[2,16,64], index: 0, kind: input, shape index: {}]
  %s1 = inlined_call_operand.vmem [shape: bf16[192,64], index: 1, kind: input, shape index: {}]
  %s2 = inlined_call_operand.vmem [shape: bf16[64,64], index: 2, kind: input, shape index: {}]
  %s3 = inlined_call_operand.vmem [shape: f32[1,64], index: 3, kind: input, shape index: {}]
  %s4 = inlined_call_operand.hbm [shape: f32[2,16,64], index: 4, kind: output, shape index: {0}]
  %s5 = inlined_call_operand.hbm [shape: f32[2,8,16,16], index: 5, kind: output, shape index: {1}]
  %6 = xla_tuple %s4, %s5
  %s7 = sld [smem:[#allocation0]]
  $region65: #{attention_forward.1} parent=0
    _
  %s9 = ssub.s32 1, %s7
  %s10 = scalar_select 0, %s9, %s7
  $region1: #{attention_forward.1} parent=0
    #allocation3 [shape = 'u8[16384]{0}', space=vmem, size = 0x4000, scoped, tag = 'output window, operand 0']
    #allocation4 [shape = 's32[2]{0}', space=sflag, size = 0x8, scoped, tag = 'scoped memory for attention_forward.1']
    #allocation5 [shape = 'u8[65536]{0}', space=vmem, size = 0x10000, scoped, tag = 'output window, operand 1']
    #allocation6 [shape = 's32[2]{0}', space=sflag, size = 0x8, scoped, tag = 'scoped memory for attention_forward.1']
    %11 = vsyncpa [#allocation4], 0
    %s12 = scalar_lea.sflag [#allocation4], 1
    %13 = vsyncpa %s12, 0
    %14 = vsyncpa [#allocation6], 0
    %s15 = scalar_lea.sflag [#allocation6], 1
    %16 = vsyncpa %s15, 0
    loop: start=0, step=1, limit=6
    $region2: #{attention_forward.1} parent=1 // loop_pre_header
      _
    $region3: #{attention_forward.1} parent=1 // loop_header
      %s18 = sphi 0, %s22
      %p19 = scmp.ge.s32.totalorder %s18, 6
      %s25 = sphi 0, %s37
      %s26 = sphi 0, %s33
      %s27 = sphi 0, %s25
      %s28 = sphi 0, %s26
      %s29 = sphi 0, %s27
      %s30 = sphi 0, %s28
      %s40 = sphi 0, %s42
      %s43 = sphi 0, %s40
      %s44 = sphi 0, %s43
      %s60 = sphi 0, %s44
      %s64 = sphi 0, %s64
      %s66 = sphi 0, %s64
      %s67 = sphi 0, %s66
      %s81 = sphi 0, %s67
      %s85 = sphi 0, %s85
      %s87 = sphi 0, %s85
      %s88 = sphi 0, %s87
      %s102 = sphi 0, %s88
      %s106 = sphi 0, %s106
      %s108 = sphi 0, %s106
      %s109 = sphi 0, %s108
      %s123 = sphi 0, %s109
      %s129 = sphi 0, %s131
      %s132 = sphi 0, %s129
      %s133 = sphi 0, %s132
      %s149 = sphi 0, %s133
      %s157 = sphi 0, %s159
      %s160 = sphi 0, %s157
      %s161 = sphi 0, %s160
      %s177 = sphi 0, %s161
    $region4: #{attention_forward.1} parent=1 // loop_header_branch
      %21 = sbr.rel (%p19) target = $region8
    $region5: #{attention_forward.1} parent=1 // loop_body
      %s23 = ssub.s32 %s18, 1
      %s24 = ssub.s32 %s18, 2
      %s31 = sadd.s32 1, %s26
      %p32 = scmp.ge.s32.totalorder %s31, 2
      %s33 = scalar_select %p32, 0, %s31
      %s34 = sadd.s32 1, %s25
      %s35 = scalar_select %p32, %s34, %s25
      %p36 = scmp.ge.s32.totalorder %s35, 2
      %s37 = scalar_select %p36, 0, %s35
      %s38 = ssub.s32 %s25, %s37
      %p39 = scmp.eq.s32.totalorder %s38, 0
      %s41 = sadd.s32 %s40, 1
      %s42 = scalar_select %p39, %s40, %s41
      %p45 = pneg %p39
      %p46 = scmp.eq.s32.totalorder %s18, 3
      %p47 = por %p45, %p46
      %p48 = scmp.ne.s32.totalorder %s40, %s43
      %p49 = scmp.eq.s32.totalorder %s18, 0
      %p50 = por %p48, %p49
      %p51 = scmp.ne.s32.totalorder %s40, %s43
      %p52 = scmp.eq.s32.totalorder %s23, 3
      %p53 = por %p51, %p52
      %p54 = scmp.ne.s32.totalorder %s43, %s44
      %p55 = scmp.eq.s32.totalorder %s23, 0
      %p56 = por %p54, %p55
      %p57 = scmp.ne.s32.totalorder %s43, %s44
      %p58 = scmp.eq.s32.totalorder %s24, 3
      %p59 = por %p57, %p58
      %p61 = scmp.ne.s32.totalorder %s44, %s60
      %p62 = scmp.eq.s32.totalorder %s24, 0
      %p63 = por %p61, %p62
      %s65 = sadd.s32 %s64, 1
      %p68 = scmp.eq.s32.totalorder %s18, 3
      %p69 = scmp.ne.s32.totalorder %s64, %s66
      %p70 = scmp.eq.s32.totalorder %s18, 0
      %p71 = por %p69, %p70
      %p72 = scmp.ne.s32.totalorder %s64, %s66
      %p73 = scmp.eq.s32.totalorder %s23, 3
      %p74 = por %p72, %p73
      %p75 = scmp.ne.s32.totalorder %s66, %s67
      %p76 = scmp.eq.s32.totalorder %s23, 0
      %p77 = por %p75, %p76
      %p78 = scmp.ne.s32.totalorder %s66, %s67
      %p79 = scmp.eq.s32.totalorder %s24, 3
      %p80 = por %p78, %p79
      %p82 = scmp.ne.s32.totalorder %s67, %s81
      %p83 = scmp.eq.s32.totalorder %s24, 0
      %p84 = por %p82, %p83
      %s86 = sadd.s32 %s85, 1
      %p89 = scmp.eq.s32.totalorder %s18, 3
      %p90 = scmp.ne.s32.totalorder %s85, %s87
      %p91 = scmp.eq.s32.totalorder %s18, 0
      %p92 = por %p90, %p91
      %p93 = scmp.ne.s32.totalorder %s85, %s87
      %p94 = scmp.eq.s32.totalorder %s23, 3
      %p95 = por %p93, %p94
      %p96 = scmp.ne.s32.totalorder %s87, %s88
      %p97 = scmp.eq.s32.totalorder %s23, 0
      %p98 = por %p96, %p97
      %p99 = scmp.ne.s32.totalorder %s87, %s88
      %p100 = scmp.eq.s32.totalorder %s24, 3
      %p101 = por %p99, %p100
      %p103 = scmp.ne.s32.totalorder %s88, %s102
      %p104 = scmp.eq.s32.totalorder %s24, 0
      %p105 = por %p103, %p104
      %s107 = sadd.s32 %s106, 1
      %p110 = scmp.eq.s32.totalorder %s18, 3
      %p111 = scmp.ne.s32.totalorder %s106, %s108
      %p112 = scmp.eq.s32.totalorder %s18, 0
      %p113 = por %p111, %p112
      %p114 = scmp.ne.s32.totalorder %s106, %s108
      %p115 = scmp.eq.s32.totalorder %s23, 3
      %p116 = por %p114, %p115
      %p117 = scmp.ne.s32.totalorder %s108, %s109
      %p118 = scmp.eq.s32.totalorder %s23, 0
      %p119 = por %p117, %p118
      %p120 = scmp.ne.s32.totalorder %s108, %s109
      %p121 = scmp.eq.s32.totalorder %s24, 3
      %p122 = por %p120, %p121
      %p124 = scmp.ne.s32.totalorder %s109, %s123
      %p125 = scmp.eq.s32.totalorder %s24, 0
      %p126 = por %p124, %p125
      %s127 = ssub.s32 %s25, %s37
      %p128 = scmp.eq.s32.totalorder %s127, 0
      %s130 = sadd.s32 %s129, 1
      %s131 = scalar_select %p128, %s129, %s130
      %p134 = pneg %p128
      %p135 = scmp.eq.s32.totalorder %s18, 3
      %p136 = por %p134, %p135
      %p137 = scmp.ne.s32.totalorder %s129, %s132
      %p138 = scmp.eq.s32.totalorder %s18, 0
      %p139 = por %p137, %p138
      %p140 = scmp.ne.s32.totalorder %s129, %s132
      %p141 = scmp.eq.s32.totalorder %s23, 3
      %p142 = por %p140, %p141
      %p143 = scmp.ne.s32.totalorder %s132, %s133
      %p144 = scmp.eq.s32.totalorder %s23, 0
      %p145 = por %p143, %p144
      %p146 = scmp.ne.s32.totalorder %s132, %s133
      %p147 = scmp.eq.s32.totalorder %s24, 3
      %p148 = por %p146, %p147
      %p150 = scmp.ne.s32.totalorder %s133, %s149
      %p151 = scmp.eq.s32.totalorder %s24, 0
      %p152 = por %p150, %p151
      %s153 = ssub.s32 %s25, %s37
      %s154 = ssub.s32 %s26, %s33
      %s155 = sor.u32 %s153, %s154
      %p156 = scmp.eq.s32.totalorder %s155, 0
      %s158 = sadd.s32 %s157, 1
      %s159 = scalar_select %p156, %s157, %s158
      %p162 = pneg %p156
      %p163 = scmp.eq.s32.totalorder %s18, 3
      %p164 = por %p162, %p163
      %p165 = scmp.ne.s32.totalorder %s157, %s160
      %p166 = scmp.eq.s32.totalorder %s18, 0
      %p167 = por %p165, %p166
      %p168 = scmp.ne.s32.totalorder %s157, %s160
      %p169 = scmp.eq.s32.totalorder %s23, 3
      %p170 = por %p168, %p169
      %p171 = scmp.ne.s32.totalorder %s160, %s161
      %p172 = scmp.eq.s32.totalorder %s23, 0
      %p173 = por %p171, %p172
      %p174 = scmp.ne.s32.totalorder %s160, %s161
      %p175 = scmp.eq.s32.totalorder %s24, 3
      %p176 = por %p174, %p175
      %p178 = scmp.ne.s32.totalorder %s161, %s177
      %p179 = scmp.eq.s32.totalorder %s24, 0
      %p180 = por %p178, %p179
      %p181 = scmp.le.s32.totalorder 1, %s18
      %p182 = scmp.lt.s32.totalorder %s18, 5
      %p183 = pnand %p181, %p182
      %p184 = pneg %p183
      // Predicated region
      $region9: #{attention_forward.1} parent=5 // pred_check
        _
      $region10: #{attention_forward.1} parent=5 // pred_check_branch
        %186 = sbr.rel (%p183) target = $region12
      $region11: #{attention_forward.1} parent=5 // pred_region
        %s187 = ssub.s32 %s18, 1
        // Predicated region
        $region13: #{attention_forward.1} parent=11 // pred_check
          %p188 = pneg %p77
        $region14: #{attention_forward.1} parent=11 // pred_check_branch
          %190 = sbr.rel (%p188) target = $region16
        $region15: #{attention_forward.1} parent=11 // pred_region
          _
        $region16: #{attention_forward.1} parent=11 // pred_fallthru
          _
        // Predicated region
        $region17: #{attention_forward.1} parent=11 // pred_check
          %p191 = pneg %p98
        $region18: #{attention_forward.1} parent=11 // pred_check_branch
          %193 = sbr.rel (%p191) target = $region20
        $region19: #{attention_forward.1} parent=11 // pred_region
          _
        $region20: #{attention_forward.1} parent=11 // pred_fallthru
          _
        // Predicated region
        $region21: #{attention_forward.1} parent=11 // pred_check
          %p194 = pneg %p119
        $region22: #{attention_forward.1} parent=11 // pred_check_branch
          %196 = sbr.rel (%p194) target = $region24
        $region23: #{attention_forward.1} parent=11 // pred_region
          _
        $region24: #{attention_forward.1} parent=11 // pred_fallthru
          _
      $region12: #{attention_forward.1} parent=5 // pred_fallthru
        _
      %p197 = scmp.lt.s32.totalorder %s18, 4
      // Predicated region
      $region25: #{attention_forward.1} parent=5 // pred_check
        %p198 = pneg %p197
      $region26: #{attention_forward.1} parent=5 // pred_check_branch
        %200 = sbr.rel (%p198) target = $region28
      $region27: #{attention_forward.1} parent=5 // pred_region
        // Predicated region
        $region29: #{attention_forward.1} parent=27 // pred_check
          %p201 = pneg %p50
        $region30: #{attention_forward.1} parent=27 // pred_check_branch
          %203 = sbr.rel (%p201) target = $region32
        $region31: #{attention_forward.1} parent=27 // pred_region
          %p204 = scmp.lt.s32.totalorder %s25, 1
          %s205 = scalar_select %p204, %s25, 1
          %s206 = smul.addr %s205, 2
          %s207 = smul.addr %s206, 8
          %s208 = scalar_lea.vmem %s0, %s207
        $region32: #{attention_forward.1} parent=27 // pred_fallthru
          _
      $region28: #{attention_forward.1} parent=5 // pred_fallthru
        _
      %p209 = scmp.le.s32.totalorder 1, %s18
      %p210 = scmp.lt.s32.totalorder %s18, 5
      %p211 = pnand %p209, %p210
      %p212 = pneg %p211
      // Predicated region
      $region33: #{attention_forward.1} parent=5 // pred_check
        _
      $region34: #{attention_forward.1} parent=5 // pred_check_branch
        %214 = sbr.rel (%p211) target = $region36
      $region35: #{attention_forward.1} parent=5 // pred_region
        %s215 = ssub.s32 %s18, 1
        %p216 = scmp.lt.s32.totalorder %s27, 1
        %s217 = scalar_select %p216, %s27, 1
        %s218 = smul.addr %s217, 2
        %s219 = smul.addr %s218, 8
        %s220 = scalar_lea.vmem %s0, %s219
        %p221 = pneg %p56
        %p222 = pneg %p53
        %p223 = pneg %p77
        %p224 = pneg %p74
        %p225 = pneg %p98
        %p226 = pneg %p95
        %p227 = pneg %p119
        %p228 = pneg %p116
        %p229 = pneg %p145
        %p230 = pneg %p142
        %s231 = sand.u32 %s132, 1
        %s232 = scalar_lea.sflag [#allocation4], %s231
        %s233 = sand.u32 %s132, 1
        %s234 = smul.addr %s233, 16
        %s235 = scalar_lea.vmem [#allocation3], %s234
        %p236 = pneg %p173
        %p237 = pneg %p170
        %s238 = sand.u32 %s160, 1
        %s239 = scalar_lea.sflag [#allocation6], %s238
        %s240 = sand.u32 %s160, 1
        %s241 = smul.addr %s240, 64
        %s242 = scalar_lea.vmem [#allocation5], %s241
        %p243 = scmp.lt.s32.totalorder %s27, 1
        %s244 = scalar_select %p243, %s27, 1
        %s245 = smul.addr %s244, 2
        %s246 = smul.addr %s245, 8
        %s247 = scalar_lea.vmem %s0, %s246
        %s248 = smul.u32 4, %s28
        %p250 = scmp.eq.s32.totalorder %s28, 0
        // Predicated region
        $region37: #{attention_forward.1} parent=35 // pred_check
          %p251 = pneg %p250
        $region38: #{attention_forward.1} parent=35 // pred_check_branch
          %253 = sbr.rel (%p251) target = $region40
        $region39: #{attention_forward.1} parent=35 // pred_region
          %vm254 = vcmask 523264
          %255 = vst.msk [vmem:[#allocation2] sm:$0xff] %vm254, 0.0
          %256 = vst.msk [vmem:[#allocation2 + $0x8] sm:$0xff] %vm254, 0.0
        $region40: #{attention_forward.1} parent=35 // pred_fallthru
          _
        %v257 = vld [vmem:[%s247] sm:$0xff]
        %v258 = vld [vmem:[%s247 + $0x8] sm:$0xff]
        %v259 = vpack.c.bf16 %v258, %v257
        %s260 = smul.u32 %s28, 32
        %s261 = sadd.s32 %s260, 64
        %s262 = sadd.s32 %s260, 128
        %s263 = sshra.s32 %s260, 3
        %s264 = sand.u32 %s260, 7
        %s265 = smul.addr %s263, 4
        %s266 = scalar_lea.vmem %s1, %s265
        %v267 = vld [vmem:[%s266] sm:$0xf]
        %v268 = vld [vmem:[%s266 + $0x4] sm:$0xf]
        %v269 = vld [vmem:[%s266 + $0x8] sm:$0xf]
        %v270 = vld [vmem:[%s266 + $0xc] sm:$0xf]
        %s271 = sshra.s32 %s261, 3
        %s272 = sand.u32 %s261, 7
        %s273 = smul.addr %s271, 4
        %s274 = scalar_lea.vmem %s1, %s273
        %v275 = vld [vmem:[%s274] sm:$0xf]
        %v276 = vld [vmem:[%s274 + $0x4] sm:$0xf]
        %v277 = vld [vmem:[%s274 + $0x8] sm:$0xf]
        %v278 = vld [vmem:[%s274 + $0xc] sm:$0xf]
        %s279 = sshra.s32 %s262, 3
        %s280 = sand.u32 %s262, 7
        %s281 = smul.addr %s279, 4
        %s282 = scalar_lea.vmem %s1, %s281
        %v283 = vld [vmem:[%s282] sm:$0xf]
        %v284 = vld [vmem:[%s282 + $0x4] sm:$0xf]
        %v285 = vld [vmem:[%s282 + $0x8] sm:$0xf]
        %v286 = vld [vmem:[%s282 + $0xc] sm:$0xf]
        %v291 = vunpack.c.l.b16 %v267
        %v292 = vunpack.c.l.b16 %v268
        %v293 = vunpack.c.l.b16 %v269
        %v294 = vunpack.c.l.b16 %v270
        %v295 = vpack.c.b16 %v292, %v291
        %v296 = vpack.c.b16 %v294, %v293
        %vm297 = vcmask 523264
        %v299 = vsel %vm297, %v259, 0
        %v302 = vsel %vm297, %v295, 0
        %v305 = vsel %vm297, %v296, 0
        %307 = vmatprep.subr.bf16.mxu0 0
        %308 = vmatpush1.bf16.xpose.msra.mxu0 0
        %309 = vmatprep.subr.bf16.mxu0 0
        %310 = vmatpush1.bf16.xpose.msra.mxu0 0
        %311 = vmatprep.subr.bf16.mxu0 0
        %312 = vmatpush1.bf16.xpose.msra.mxu0 0
        %313 = vmatprep.subr.bf16.mxu0 0
        %314 = vmatpush1.bf16.xpose.msra.mxu0 0
        %315 = vmatprep.subr.bf16.mxu0 0
        %316 = vmatpush1.bf16.xpose.msra.mxu0 0
        %317 = vmatprep.subr.bf16.mxu0 0
        %318 = vmatpush1.bf16.xpose.msra.mxu0 0
        %319 = vmatprep.subr.bf16.mxu0 0
        %320 = vmatpush1.bf16.xpose.msra.mxu0 %v305
        %321 = vmatprep.subr.bf16.mxu0 0
        %322 = vmatpush1.bf16.xpose.msra.mxu0 %v302
        %323 = vmatprep.subr.bf16.mxu0 0
        %324 = vmatpush2.bf16.xpose.msra.mxu0 0
        %325 = vmatprep.subr.bf16.mxu0 0
        %326 = vmatpush2.bf16.xpose.msra.mxu0 0
        %327 = vmatprep.subr.bf16.mxu0 0
        %328 = vmatpush2.bf16.xpose.msra.mxu0 0
        %329 = vmatprep.subr.bf16.mxu0 0
        %330 = vmatpush2.bf16.xpose.msra.mxu0 0
        %331 = vmatprep.subr.bf16.mxu0 0
        %332 = vmatpush2.bf16.xpose.msra.mxu0 0
        %333 = vmatprep.subr.bf16.mxu0 0
        %334 = vmatpush2.bf16.xpose.msra.mxu0 0
        %335 = vmatprep.subr.bf16.mxu0 0
        %336 = vmatpush2.bf16.xpose.msra.mxu0 0
        %337 = vmatprep.subr.bf16.mxu0 0
        %338 = vmatpush2.bf16.xpose.msra.mxu0 0
        %339 = vmatprep.mubr.bf16.mxu0 0
        %340 = vmatmul.mubr.bf16.gmra.mxu0 %v299
        %v341 = vpop.f32.mrf.mxu0
        %v342 = vadd.f32 0.0, %v341
        %v343 = vpop.f32.mrf.mxu0
        %v344 = vpop.f32.mrf.mxu0
        %v345 = vadd.f32 0.0, %v344
        %v346 = vpop.f32.mrf.mxu0
        %347 = vdwg.mxu0
        %v348 = vpack.c.bf16 %v345, %v342
        %v353 = vunpack.c.l.b16 %v275
        %v354 = vunpack.c.l.b16 %v276
        %v355 = vunpack.c.l.b16 %v277
        %v356 = vunpack.c.l.b16 %v278
        %v357 = vpack.c.b16 %v354, %v353
        %v358 = vpack.c.b16 %v356, %v355
        %v360 = vsel %vm297, %v357, 0
        %v363 = vsel %vm297, %v358, 0
        %365 = vmatprep.subr.bf16.mxu0 0
        %366 = vmatpush1.bf16.xpose.msra.mxu0 0
        %367 = vmatprep.subr.bf16.mxu0 0
        %368 = vmatpush1.bf16.xpose.msra.mxu0 0
        %369 = vmatprep.subr.bf16.mxu0 0
        %370 = vmatpush1.bf16.xpose.msra.mxu0 0
        %371 = vmatprep.subr.bf16.mxu0 0
        %372 = vmatpush1.bf16.xpose.msra.mxu0 0
        %373 = vmatprep.subr.bf16.mxu0 0
        %374 = vmatpush1.bf16.xpose.msra.mxu0 0
        %375 = vmatprep.subr.bf16.mxu0 0
        %376 = vmatpush1.bf16.xpose.msra.mxu0 0
        %377 = vmatprep.subr.bf16.mxu0 0
        %378 = vmatpush1.bf16.xpose.msra.mxu0 %v363
        %379 = vmatprep.subr.bf16.mxu0 0
        %380 = vmatpush1.bf16.xpose.msra.mxu0 %v360
        %381 = vmatprep.subr.bf16.mxu0 0
        %382 = vmatpush2.bf16.xpose.msra.mxu0 0
        %383 = vmatprep.subr.bf16.mxu0 0
        %384 = vmatpush2.bf16.xpose.msra.mxu0 0
        %385 = vmatprep.subr.bf16.mxu0 0
        %386 = vmatpush2.bf16.xpose.msra.mxu0 0
        %387 = vmatprep.subr.bf16.mxu0 0
        %388 = vmatpush2.bf16.xpose.msra.mxu0 0
        %389 = vmatprep.subr.bf16.mxu0 0
        %390 = vmatpush2.bf16.xpose.msra.mxu0 0
        %391 = vmatprep.subr.bf16.mxu0 0
        %392 = vmatpush2.bf16.xpose.msra.mxu0 0
        %393 = vmatprep.subr.bf16.mxu0 0
        %394 = vmatpush2.bf16.xpose.msra.mxu0 0
        %395 = vmatprep.subr.bf16.mxu0 0
        %396 = vmatpush2.bf16.xpose.msra.mxu0 0
        %397 = vmatprep.mubr.bf16.mxu0 0
        %398 = vmatmul.mubr.bf16.gmra.mxu0 %v299
        %v399 = vpop.f32.mrf.mxu0
        %v400 = vadd.f32 0.0, %v399
        %v401 = vpop.f32.mrf.mxu0
        %v402 = vpop.f32.mrf.mxu0
        %v403 = vadd.f32 0.0, %v402
        %v404 = vpop.f32.mrf.mxu0
        %405 = vdwg.mxu0
        %v406 = vpack.c.bf16 %v403, %v400
        %v411 = vunpack.c.l.b16 %v283
        %v412 = vunpack.c.l.b16 %v284
        %v413 = vunpack.c.l.b16 %v285
        %v414 = vunpack.c.l.b16 %v286
        %v415 = vpack.c.b16 %v412, %v411
        %v416 = vpack.c.b16 %v414, %v413
        %v418 = vsel %vm297, %v415, 0
        %v421 = vsel %vm297, %v416, 0
        %423 = vmatprep.subr.bf16.mxu0 0
        %424 = vmatpush1.bf16.xpose.msra.mxu0 0
        %425 = vmatprep.subr.bf16.mxu0 0
        %426 = vmatpush1.bf16.xpose.msra.mxu0 0
        %427 = vmatprep.subr.bf16.mxu0 0
        %428 = vmatpush1.bf16.xpose.msra.mxu0 0
        %429 = vmatprep.subr.bf16.mxu0 0
        %430 = vmatpush1.bf16.xpose.msra.mxu0 0
        %431 = vmatprep.subr.bf16.mxu0 0
        %432 = vmatpush1.bf16.xpose.msra.mxu0 0
        %433 = vmatprep.subr.bf16.mxu0 0
        %434 = vmatpush1.bf16.xpose.msra.mxu0 0
        %435 = vmatprep.subr.bf16.mxu0 0
        %436 = vmatpush1.bf16.xpose.msra.mxu0 %v421
        %437 = vmatprep.subr.bf16.mxu0 0
        %438 = vmatpush1.bf16.xpose.msra.mxu0 %v418
        %439 = vmatprep.subr.bf16.mxu0 0
        %440 = vmatpush2.bf16.xpose.msra.mxu0 0
        %441 = vmatprep.subr.bf16.mxu0 0
        %442 = vmatpush2.bf16.xpose.msra.mxu0 0
        %443 = vmatprep.subr.bf16.mxu0 0
        %444 = vmatpush2.bf16.xpose.msra.mxu0 0
        %445 = vmatprep.subr.bf16.mxu0 0
        %446 = vmatpush2.bf16.xpose.msra.mxu0 0
        %447 = vmatprep.subr.bf16.mxu0 0
        %448 = vmatpush2.bf16.xpose.msra.mxu0 0
        %449 = vmatprep.subr.bf16.mxu0 0
        %450 = vmatpush2.bf16.xpose.msra.mxu0 0
        %451 = vmatprep.subr.bf16.mxu0 0
        %452 = vmatpush2.bf16.xpose.msra.mxu0 0
        %453 = vmatprep.subr.bf16.mxu0 0
        %454 = vmatpush2.bf16.xpose.msra.mxu0 0
        %455 = vmatprep.mubr.bf16.mxu0 0
        %456 = vmatmul.mubr.bf16.gmra.mxu0 %v299
        %v457 = vpop.f32.mrf.mxu0
        %v458 = vadd.f32 0.0, %v457
        %v459 = vpop.f32.mrf.mxu0
        %v460 = vpop.f32.mrf.mxu0
        %v461 = vadd.f32 0.0, %v460
        %v462 = vpop.f32.mrf.mxu0
        %463 = vdwg.mxu0
        %v464 = vpack.c.bf16 %v461, %v458
        %vm465 = vcmask 64512
        %v467 = vsel %vm465, %v348, 0
        %v470 = vsel %vm465, %v406, 0
        %472 = vmatprep.subr.bf16.mxu0 0
        %473 = vmatpush1.bf16.xpose.msra.mxu0 0
        %474 = vmatprep.subr.bf16.mxu0 0
        %475 = vmatpush1.bf16.xpose.msra.mxu0 0
        %476 = vmatprep.subr.bf16.mxu0 0
        %477 = vmatpush1.bf16.xpose.msra.mxu0 0
        %478 = vmatprep.subr.bf16.mxu0 0
        %479 = vmatpush1.bf16.xpose.msra.mxu0 0
        %480 = vmatprep.subr.bf16.mxu0 0
        %481 = vmatpush1.bf16.xpose.msra.mxu0 0
        %482 = vmatprep.subr.bf16.mxu0 0
        %483 = vmatpush1.bf16.xpose.msra.mxu0 0
        %484 = vmatprep.subr.bf16.mxu0 0
        %485 = vmatpush1.bf16.xpose.msra.mxu0 0
        %486 = vmatprep.subr.bf16.mxu0 0
        %487 = vmatpush1.bf16.xpose.msra.mxu0 %v470
        %488 = vmatprep.subr.bf16.mxu0 0
        %489 = vmatpush2.bf16.xpose.msra.mxu0 0
        %490 = vmatprep.subr.bf16.mxu0 0
        %491 = vmatpush2.bf16.xpose.msra.mxu0 0
        %492 = vmatprep.subr.bf16.mxu0 0
        %493 = vmatpush2.bf16.xpose.msra.mxu0 0
        %494 = vmatprep.subr.bf16.mxu0 0
        %495 = vmatpush2.bf16.xpose.msra.mxu0 0
        %496 = vmatprep.subr.bf16.mxu0 0
        %497 = vmatpush2.bf16.xpose.msra.mxu0 0
        %498 = vmatprep.subr.bf16.mxu0 0
        %499 = vmatpush2.bf16.xpose.msra.mxu0 0
        %500 = vmatprep.subr.bf16.mxu0 0
        %501 = vmatpush2.bf16.xpose.msra.mxu0 0
        %502 = vmatprep.subr.bf16.mxu0 0
        %503 = vmatpush2.bf16.xpose.msra.mxu0 0
        %504 = vmatprep.mubr.bf16.mxu0 0
        %505 = vmatmul.mubr.bf16.gmra.mxu0 %v467
        %v506 = vpop.f32.mrf.mxu0
        %v507 = vadd.f32 0.0, %v506
        %v508 = vpop.f32.mrf.mxu0
        %v509 = vpop.f32.mrf.mxu0
        %v510 = vadd.f32 0.0, %v509
        %v511 = vpop.f32.mrf.mxu0
        %512 = vdwg.mxu0
        %vm513 = vcmask 130048
        %v514 = vsel %vm513, %v507, -inf
        %515 = vmax.xlane.f32.xlu0 %v514
        %v516 = vpop.xlane.xlu0 %515
        %v517 = vsel %vm513, %v510, -inf
        %518 = vmax.xlane.f32.xlu0 %v517
        %v519 = vpop.xlane.xlu0 %518
        %v520 = vsub.f32 %v507, %v516
        %v521 = vsub.f32 %v510, %v519
        %v522 = vmul.f32 %v520, 1.442695
        %v523 = vpow.pop %v522
        %v524 = vmul.f32 %v521, 1.442695
        %v525 = vpow.pop %v524
        %v526 = vsel %vm513, %v523, 0.0
        %527 = vadd.xlane.f32.xlu0 %v526
        %v528 = vpop.xlane.xlu0 %527
        %v529 = vsel %vm513, %v525, 0.0
        %530 = vadd.xlane.f32.xlu0 %v529
        %v531 = vpop.xlane.xlu0 %530
        %v532 = vrcp.pop %v528
        %v533 = vrcp.pop %v531
        %v534 = vmul.f32 %v523, %v532
        %v535 = vmul.f32 %v525, %v533
        %536 = vst.msk [vmem:[%s242] sm:$0xff] %vm513, %v534
        %537 = vst.msk [vmem:[%s242 + $0x8] sm:$0xff] %vm513, %v535
        %v538 = vpack.c.bf16 %v535, %v534
        %v540 = vsel %vm513, %v538, 0
        %542 = vmatprep.subr.bf16.mxu0 0
        %543 = vmatpush1.bf16.msra.mxu0 0
        %544 = vmatprep.subr.bf16.mxu0 0
        %545 = vmatpush1.bf16.msra.mxu0 0
        %546 = vmatprep.subr.bf16.mxu0 0
        %547 = vmatpush1.bf16.msra.mxu0 0
        %548 = vmatprep.subr.bf16.mxu0 0
        %549 = vmatpush1.bf16.msra.mxu0 0
        %550 = vmatprep.subr.bf16.mxu0 0
        %551 = vmatpush1.bf16.msra.mxu0 0
        %552 = vmatprep.subr.bf16.mxu0 0
        %553 = vmatpush1.bf16.msra.mxu0 0
        %554 = vmatprep.subr.bf16.mxu0 0
        %555 = vmatpush1.bf16.msra.mxu0 0
        %556 = vmatprep.subr.bf16.mxu0 0
        %557 = vmatpush1.bf16.msra.mxu0 %v464
        %558 = vmatprep.subr.bf16.mxu0 0
        %559 = vmatpush2.bf16.msra.mxu0 0
        %560 = vmatprep.subr.bf16.mxu0 0
        %561 = vmatpush2.bf16.msra.mxu0 0
        %562 = vmatprep.subr.bf16.mxu0 0
        %563 = vmatpush2.bf16.msra.mxu0 0
        %564 = vmatprep.subr.bf16.mxu0 0
        %565 = vmatpush2.bf16.msra.mxu0 0
        %566 = vmatprep.subr.bf16.mxu0 0
        %567 = vmatpush2.bf16.msra.mxu0 0
        %568 = vmatprep.subr.bf16.mxu0 0
        %569 = vmatpush2.bf16.msra.mxu0 0
        %570 = vmatprep.subr.bf16.mxu0 0
        %571 = vmatpush2.bf16.msra.mxu0 0
        %572 = vmatprep.subr.bf16.mxu0 0
        %573 = vmatpush2.bf16.msra.mxu0 0
        %574 = vmatprep.mubr.bf16.mxu0 0
        %575 = vmatmul.mubr.bf16.gmra.mxu0 %v540
        %v576 = vpop.f32.mrf.mxu0
        %v577 = vadd.f32 0.0, %v576
        %v578 = vpop.f32.mrf.mxu0
        %v579 = vpop.f32.mrf.mxu0
        %v580 = vadd.f32 0.0, %v579
        %v581 = vpop.f32.mrf.mxu0
        %582 = vdwg.mxu0
        %584 = vrot.lane.b32.xlu0 %v348, 120
        %v585 = vpop.permute.xlu0 %584
        %587 = vrot.lane.b32.xlu0 %v406, 120
        %v588 = vpop.permute.xlu0 %587
        %v590 = vsel %vm465, %v585, 0
        %v593 = vsel %vm465, %v588, 0
        %595 = vmatprep.subr.bf16.mxu0 0
        %596 = vmatpush1.bf16.xpose.msra.mxu0 0
        %597 = vmatprep.subr.bf16.mxu0 0
        %598 = vmatpush1.bf16.xpose.msra.mxu0 0
        %599 = vmatprep.subr.bf16.mxu0 0
        %600 = vmatpush1.bf16.xpose.msra.mxu0 0
        %601 = vmatprep.subr.bf16.mxu0 0
        %602 = vmatpush1.bf16.xpose.msra.mxu0 0
        %603 = vmatprep.subr.bf16.mxu0 0
        %604 = vmatpush1.bf16.xpose.msra.mxu0 0
        %605 = vmatprep.subr.bf16.mxu0 0
        %606 = vmatpush1.bf16.xpose.msra.mxu0 0
        %607 = vmatprep.subr.bf16.mxu0 0
        %608 = vmatpush1.bf16.xpose.msra.mxu0 0
        %609 = vmatprep.subr.bf16.mxu0 0
        %610 = vmatpush1.bf16.xpose.msra.mxu0 %v593
        %611 = vmatprep.subr.bf16.mxu0 0
        %612 = vmatpush2.bf16.xpose.msra.mxu0 0
        %613 = vmatprep.subr.bf16.mxu0 0
        %614 = vmatpush2.bf16.xpose.msra.mxu0 0
        %615 = vmatprep.subr.bf16.mxu0 0
        %616 = vmatpush2.bf16.xpose.msra.mxu0 0
        %617 = vmatprep.subr.bf16.mxu0 0
        %618 = vmatpush2.bf16.xpose.msra.mxu0 0
        %619 = vmatprep.subr.bf16.mxu0 0
        %620 = vmatpush2.bf16.xpose.msra.mxu0 0
        %621 = vmatprep.subr.bf16.mxu0 0
        %622 = vmatpush2.bf16.xpose.msra.mxu0 0
        %623 = vmatprep.subr.bf16.mxu0 0
        %624 = vmatpush2.bf16.xpose.msra.mxu0 0
        %625 = vmatprep.subr.bf16.mxu0 0
        %626 = vmatpush2.bf16.xpose.msra.mxu0 0
        %627 = vmatprep.mubr.bf16.mxu0 0
        %628 = vmatmul.mubr.bf16.gmra.mxu0 %v590
        %v629 = vpop.f32.mrf.mxu0
        %v630 = vadd.f32 0.0, %v629
        %v631 = vpop.f32.mrf.mxu0
        %v632 = vpop.f32.mrf.mxu0
        %v633 = vadd.f32 0.0, %v632
        %v634 = vpop.f32.mrf.mxu0
        %635 = vdwg.mxu0
        %v636 = vsel %vm513, %v630, -inf
        %637 = vmax.xlane.f32.xlu0 %v636
        %v638 = vpop.xlane.xlu0 %637
        %v639 = vsel %vm513, %v633, -inf
        %640 = vmax.xlane.f32.xlu0 %v639
        %v641 = vpop.xlane.xlu0 %640
        %v642 = vsub.f32 %v630, %v638
        %v643 = vsub.f32 %v633, %v641
        %v644 = vmul.f32 %v642, 1.442695
        %v645 = vpow.pop %v644
        %v646 = vmul.f32 %v643, 1.442695
        %v647 = vpow.pop %v646
        %v648 = vsel %vm513, %v645, 0.0
        %649 = vadd.xlane.f32.xlu0 %v648
        %v650 = vpop.xlane.xlu0 %649
        %v651 = vsel %vm513, %v647, 0.0
        %652 = vadd.xlane.f32.xlu0 %v651
        %v653 = vpop.xlane.xlu0 %652
        %v654 = vrcp.pop %v650
        %v655 = vrcp.pop %v653
        %v656 = vmul.f32 %v645, %v654
        %v657 = vmul.f32 %v647, %v655
        %s658 = scalar_lea.vmem %s242, 16 [#allocation5]
        %659 = vst.msk [vmem:[%s658] sm:$0xff] %vm513, %v656
        %660 = vst.msk [vmem:[%s658 + $0x8] sm:$0xff] %vm513, %v657
        %v661 = vpack.c.bf16 %v657, %v656
        %663 = vrot.lane.b32.xlu0 %v464, 120
        %v664 = vpop.permute.xlu0 %663
        %v667 = vsel %vm513, %v661, 0
        %669 = vmatprep.subr.bf16.mxu0 0
        %670 = vmatpush1.bf16.msra.mxu0 0
        %671 = vmatprep.subr.bf16.mxu0 0
        %672 = vmatpush1.bf16.msra.mxu0 0
        %673 = vmatprep.subr.bf16.mxu0 0
        %674 = vmatpush1.bf16.msra.mxu0 0
        %675 = vmatprep.subr.bf16.mxu0 0
        %676 = vmatpush1.bf16.msra.mxu0 0
        %677 = vmatprep.subr.bf16.mxu0 0
        %678 = vmatpush1.bf16.msra.mxu0 0
        %679 = vmatprep.subr.bf16.mxu0 0
        %680 = vmatpush1.bf16.msra.mxu0 0
        %681 = vmatprep.subr.bf16.mxu0 0
        %682 = vmatpush1.bf16.msra.mxu0 0
        %683 = vmatprep.subr.bf16.mxu0 0
        %684 = vmatpush1.bf16.msra.mxu0 %v664
        %685 = vmatprep.subr.bf16.mxu0 0
        %686 = vmatpush2.bf16.msra.mxu0 0
        %687 = vmatprep.subr.bf16.mxu0 0
        %688 = vmatpush2.bf16.msra.mxu0 0
        %689 = vmatprep.subr.bf16.mxu0 0
        %690 = vmatpush2.bf16.msra.mxu0 0
        %691 = vmatprep.subr.bf16.mxu0 0
        %692 = vmatpush2.bf16.msra.mxu0 0
        %693 = vmatprep.subr.bf16.mxu0 0
        %694 = vmatpush2.bf16.msra.mxu0 0
        %695 = vmatprep.subr.bf16.mxu0 0
        %696 = vmatpush2.bf16.msra.mxu0 0
        %697 = vmatprep.subr.bf16.mxu0 0
        %698 = vmatpush2.bf16.msra.mxu0 0
        %699 = vmatprep.subr.bf16.mxu0 0
        %700 = vmatpush2.bf16.msra.mxu0 0
        %701 = vmatprep.mubr.bf16.mxu0 0
        %702 = vmatmul.mubr.bf16.gmra.mxu0 %v667
        %v703 = vpop.f32.mrf.mxu0
        %v704 = vadd.f32 0.0, %v703
        %v705 = vpop.f32.mrf.mxu0
        %v706 = vpop.f32.mrf.mxu0
        %v707 = vadd.f32 0.0, %v706
        %v708 = vpop.f32.mrf.mxu0
        %709 = vdwg.mxu0
        %710 = vrot.lane.b32.xlu0 %v348, 112
        %v711 = vpop.permute.xlu0 %710
        %712 = vrot.lane.b32.xlu0 %v406, 112
        %v713 = vpop.permute.xlu0 %712
        %v715 = vsel %vm465, %v711, 0
        %v718 = vsel %vm465, %v713, 0
        %720 = vmatprep.subr.bf16.mxu0 0
        %721 = vmatpush1.bf16.xpose.msra.mxu0 0
        %722 = vmatprep.subr.bf16.mxu0 0
        %723 = vmatpush1.bf16.xpose.msra.mxu0 0
        %724 = vmatprep.subr.bf16.mxu0 0
        %725 = vmatpush1.bf16.xpose.msra.mxu0 0
        %726 = vmatprep.subr.bf16.mxu0 0
        %727 = vmatpush1.bf16.xpose.msra.mxu0 0
        %728 = vmatprep.subr.bf16.mxu0 0
        %729 = vmatpush1.bf16.xpose.msra.mxu0 0
        %730 = vmatprep.subr.bf16.mxu0 0
        %731 = vmatpush1.bf16.xpose.msra.mxu0 0
        %732 = vmatprep.subr.bf16.mxu0 0
        %733 = vmatpush1.bf16.xpose.msra.mxu0 0
        %734 = vmatprep.subr.bf16.mxu0 0
        %735 = vmatpush1.bf16.xpose.msra.mxu0 %v718
        %736 = vmatprep.subr.bf16.mxu0 0
        %737 = vmatpush2.bf16.xpose.msra.mxu0 0
        %738 = vmatprep.subr.bf16.mxu0 0
        %739 = vmatpush2.bf16.xpose.msra.mxu0 0
        %740 = vmatprep.subr.bf16.mxu0 0
        %741 = vmatpush2.bf16.xpose.msra.mxu0 0
        %742 = vmatprep.subr.bf16.mxu0 0
        %743 = vmatpush2.bf16.xpose.msra.mxu0 0
        %744 = vmatprep.subr.bf16.mxu0 0
        %745 = vmatpush2.bf16.xpose.msra.mxu0 0
        %746 = vmatprep.subr.bf16.mxu0 0
        %747 = vmatpush2.bf16.xpose.msra.mxu0 0
        %748 = vmatprep.subr.bf16.mxu0 0
        %749 = vmatpush2.bf16.xpose.msra.mxu0 0
        %750 = vmatprep.subr.bf16.mxu0 0
        %751 = vmatpush2.bf16.xpose.msra.mxu0 0
        %752 = vmatprep.mubr.bf16.mxu0 0
        %753 = vmatmul.mubr.bf16.gmra.mxu0 %v715
        %v754 = vpop.f32.mrf.mxu0
        %v755 = vadd.f32 0.0, %v754
        %v756 = vpop.f32.mrf.mxu0
        %v757 = vpop.f32.mrf.mxu0
        %v758 = vadd.f32 0.0, %v757
        %v759 = vpop.f32.mrf.mxu0
        %760 = vdwg.mxu0
        %v761 = vsel %vm513, %v755, -inf
        %762 = vmax.xlane.f32.xlu0 %v761
        %v763 = vpop.xlane.xlu0 %762
        %v764 = vsel %vm513, %v758, -inf
        %765 = vmax.xlane.f32.xlu0 %v764
        %v766 = vpop.xlane.xlu0 %765
        %v767 = vsub.f32 %v755, %v763
        %v768 = vsub.f32 %v758, %v766
        %v769 = vmul.f32 %v767, 1.442695
        %v770 = vpow.pop %v769
        %v771 = vmul.f32 %v768, 1.442695
        %v772 = vpow.pop %v771
        %v773 = vsel %vm513, %v770, 0.0
        %774 = vadd.xlane.f32.xlu0 %v773
        %v775 = vpop.xlane.xlu0 %774
        %v776 = vsel %vm513, %v772, 0.0
        %777 = vadd.xlane.f32.xlu0 %v776
        %v778 = vpop.xlane.xlu0 %777
        %v779 = vrcp.pop %v775
        %v780 = vrcp.pop %v778
        %v781 = vmul.f32 %v770, %v779
        %v782 = vmul.f32 %v772, %v780
        %s783 = scalar_lea.vmem %s242, 32 [#allocation5]
        %784 = vst.msk [vmem:[%s783] sm:$0xff] %vm513, %v781
        %785 = vst.msk [vmem:[%s783 + $0x8] sm:$0xff] %vm513, %v782
        %v786 = vpack.c.bf16 %v782, %v781
        %787 = vrot.lane.b32.xlu0 %v464, 112
        %v788 = vpop.permute.xlu0 %787
        %v791 = vsel %vm513, %v786, 0
        %793 = vmatprep.subr.bf16.mxu0 0
        %794 = vmatpush1.bf16.msra.mxu0 0
        %795 = vmatprep.subr.bf16.mxu0 0
        %796 = vmatpush1.bf16.msra.mxu0 0
        %797 = vmatprep.subr.bf16.mxu0 0
        %798 = vmatpush1.bf16.msra.mxu0 0
        %799 = vmatprep.subr.bf16.mxu0 0
        %800 = vmatpush1.bf16.msra.mxu0 0
        %801 = vmatprep.subr.bf16.mxu0 0
        %802 = vmatpush1.bf16.msra.mxu0 0
        %803 = vmatprep.subr.bf16.mxu0 0
        %804 = vmatpush1.bf16.msra.mxu0 0
        %805 = vmatprep.subr.bf16.mxu0 0
        %806 = vmatpush1.bf16.msra.mxu0 0
        %807 = vmatprep.subr.bf16.mxu0 0
        %808 = vmatpush1.bf16.msra.mxu0 %v788
        %809 = vmatprep.subr.bf16.mxu0 0
        %810 = vmatpush2.bf16.msra.mxu0 0
        %811 = vmatprep.subr.bf16.mxu0 0
        %812 = vmatpush2.bf16.msra.mxu0 0
        %813 = vmatprep.subr.bf16.mxu0 0
        %814 = vmatpush2.bf16.msra.mxu0 0
        %815 = vmatprep.subr.bf16.mxu0 0
        %816 = vmatpush2.bf16.msra.mxu0 0
        %817 = vmatprep.subr.bf16.mxu0 0
        %818 = vmatpush2.bf16.msra.mxu0 0
        %819 = vmatprep.subr.bf16.mxu0 0
        %820 = vmatpush2.bf16.msra.mxu0 0
        %821 = vmatprep.subr.bf16.mxu0 0
        %822 = vmatpush2.bf16.msra.mxu0 0
        %823 = vmatprep.subr.bf16.mxu0 0
        %824 = vmatpush2.bf16.msra.mxu0 0
        %825 = vmatprep.mubr.bf16.mxu0 0
        %826 = vmatmul.mubr.bf16.gmra.mxu0 %v791
        %v827 = vpop.f32.mrf.mxu0
        %v828 = vadd.f32 0.0, %v827
        %v829 = vpop.f32.mrf.mxu0
        %v830 = vpop.f32.mrf.mxu0
        %v831 = vadd.f32 0.0, %v830
        %v832 = vpop.f32.mrf.mxu0
        %833 = vdwg.mxu0
        %834 = vrot.lane.b32.xlu0 %v348, 104
        %v835 = vpop.permute.xlu0 %834
        %836 = vrot.lane.b32.xlu0 %v406, 104
        %v837 = vpop.permute.xlu0 %836
        %v839 = vsel %vm465, %v835, 0
        %v842 = vsel %vm465, %v837, 0
        %844 = vmatprep.subr.bf16.mxu0 0
        %845 = vmatpush1.bf16.xpose.msra.mxu0 0
        %846 = vmatprep.subr.bf16.mxu0 0
        %847 = vmatpush1.bf16.xpose.msra.mxu0 0
        %848 = vmatprep.subr.bf16.mxu0 0
        %849 = vmatpush1.bf16.xpose.msra.mxu0 0
        %850 = vmatprep.subr.bf16.mxu0 0
        %851 = vmatpush1.bf16.xpose.msra.mxu0 0
        %852 = vmatprep.subr.bf16.mxu0 0
        %853 = vmatpush1.bf16.xpose.msra.mxu0 0
        %854 = vmatprep.subr.bf16.mxu0 0
        %855 = vmatpush1.bf16.xpose.msra.mxu0 0
        %856 = vmatprep.subr.bf16.mxu0 0
        %857 = vmatpush1.bf16.xpose.msra.mxu0 0
        %858 = vmatprep.subr.bf16.mxu0 0
        %859 = vmatpush1.bf16.xpose.msra.mxu0 %v842
        %860 = vmatprep.subr.bf16.mxu0 0
        %861 = vmatpush2.bf16.xpose.msra.mxu0 0
        %862 = vmatprep.subr.bf16.mxu0 0
        %863 = vmatpush2.bf16.xpose.msra.mxu0 0
        %864 = vmatprep.subr.bf16.mxu0 0
        %865 = vmatpush2.bf16.xpose.msra.mxu0 0
        %866 = vmatprep.subr.bf16.mxu0 0
        %867 = vmatpush2.bf16.xpose.msra.mxu0 0
        %868 = vmatprep.subr.bf16.mxu0 0
        %869 = vmatpush2.bf16.xpose.msra.mxu0 0
        %870 = vmatprep.subr.bf16.mxu0 0
        %871 = vmatpush2.bf16.xpose.msra.mxu0 0
        %872 = vmatprep.subr.bf16.mxu0 0
        %873 = vmatpush2.bf16.xpose.msra.mxu0 0
        %874 = vmatprep.subr.bf16.mxu0 0
        %875 = vmatpush2.bf16.xpose.msra.mxu0 0
        %876 = vmatprep.mubr.bf16.mxu0 0
        %877 = vmatmul.mubr.bf16.gmra.mxu0 %v839
        %v878 = vpop.f32.mrf.mxu0
        %v879 = vadd.f32 0.0, %v878
        %v880 = vpop.f32.mrf.mxu0
        %v881 = vpop.f32.mrf.mxu0
        %v882 = vadd.f32 0.0, %v881
        %v883 = vpop.f32.mrf.mxu0
        %884 = vdwg.mxu0
        %v885 = vsel %vm513, %v879, -inf
        %886 = vmax.xlane.f32.xlu0 %v885
        %v887 = vpop.xlane.xlu0 %886
        %v888 = vsel %vm513, %v882, -inf
        %889 = vmax.xlane.f32.xlu0 %v888
        %v890 = vpop.xlane.xlu0 %889
        %v891 = vsub.f32 %v879, %v887
        %v892 = vsub.f32 %v882, %v890
        %v893 = vmul.f32 %v891, 1.442695
        %v894 = vpow.pop %v893
        %v895 = vmul.f32 %v892, 1.442695
        %v896 = vpow.pop %v895
        %v897 = vsel %vm513, %v894, 0.0
        %898 = vadd.xlane.f32.xlu0 %v897
        %v899 = vpop.xlane.xlu0 %898
        %v900 = vsel %vm513, %v896, 0.0
        %901 = vadd.xlane.f32.xlu0 %v900
        %v902 = vpop.xlane.xlu0 %901
        %v903 = vrcp.pop %v899
        %v904 = vrcp.pop %v902
        %v905 = vmul.f32 %v894, %v903
        %v906 = vmul.f32 %v896, %v904
        %s907 = scalar_lea.vmem %s242, 48 [#allocation5]
        %908 = vst.msk [vmem:[%s907] sm:$0xff] %vm513, %v905
        %909 = vst.msk [vmem:[%s907 + $0x8] sm:$0xff] %vm513, %v906
        %v910 = vpack.c.bf16 %v906, %v905
        %911 = vrot.lane.b32.xlu0 %v464, 104
        %v912 = vpop.permute.xlu0 %911
        %v915 = vsel %vm513, %v910, 0
        %917 = vmatprep.subr.bf16.mxu0 0
        %918 = vmatpush1.bf16.msra.mxu0 0
        %919 = vmatprep.subr.bf16.mxu0 0
        %920 = vmatpush1.bf16.msra.mxu0 0
        %921 = vmatprep.subr.bf16.mxu0 0
        %922 = vmatpush1.bf16.msra.mxu0 0
        %923 = vmatprep.subr.bf16.mxu0 0
        %924 = vmatpush1.bf16.msra.mxu0 0
        %925 = vmatprep.subr.bf16.mxu0 0
        %926 = vmatpush1.bf16.msra.mxu0 0
        %927 = vmatprep.subr.bf16.mxu0 0
        %928 = vmatpush1.bf16.msra.mxu0 0
        %929 = vmatprep.subr.bf16.mxu0 0
        %930 = vmatpush1.bf16.msra.mxu0 0
        %931 = vmatprep.subr.bf16.mxu0 0
        %932 = vmatpush1.bf16.msra.mxu0 %v912
        %933 = vmatprep.subr.bf16.mxu0 0
        %934 = vmatpush2.bf16.msra.mxu0 0
        %935 = vmatprep.subr.bf16.mxu0 0
        %936 = vmatpush2.bf16.msra.mxu0 0
        %937 = vmatprep.subr.bf16.mxu0 0
        %938 = vmatpush2.bf16.msra.mxu0 0
        %939 = vmatprep.subr.bf16.mxu0 0
        %940 = vmatpush2.bf16.msra.mxu0 0
        %941 = vmatprep.subr.bf16.mxu0 0
        %942 = vmatpush2.bf16.msra.mxu0 0
        %943 = vmatprep.subr.bf16.mxu0 0
        %944 = vmatpush2.bf16.msra.mxu0 0
        %945 = vmatprep.subr.bf16.mxu0 0
        %946 = vmatpush2.bf16.msra.mxu0 0
        %947 = vmatprep.subr.bf16.mxu0 0
        %948 = vmatpush2.bf16.msra.mxu0 0
        %949 = vmatprep.mubr.bf16.mxu0 0
        %950 = vmatmul.mubr.bf16.gmra.mxu0 %v915
        %v951 = vpop.f32.mrf.mxu0
        %v952 = vadd.f32 0.0, %v951
        %v953 = vpop.f32.mrf.mxu0
        %v954 = vpop.f32.mrf.mxu0
        %v955 = vadd.f32 0.0, %v954
        %v956 = vpop.f32.mrf.mxu0
        %957 = vdwg.mxu0
        %960 = vrot.lane.b32.xlu0 %v704, 8
        %v961 = vpop.permute.xlu0 %960
        %962 = vrot.lane.b32.xlu0 %v707, 8
        %v963 = vpop.permute.xlu0 %962
        %968 = vrot.lane.b32.xlu0 %v828, 16
        %v969 = vpop.permute.xlu0 %968
        %970 = vrot.lane.b32.xlu0 %v831, 16
        %v971 = vpop.permute.xlu0 %970
        %976 = vrot.lane.b32.xlu0 %v952, 24
        %v977 = vpop.permute.xlu0 %976
        %978 = vrot.lane.b32.xlu0 %v955, 24
        %v979 = vpop.permute.xlu0 %978
        %v982 = vsel %vm465, %v577, %v961
        %v983 = vsel %vm465, %v580, %v963
        %v984 = vsel %vm513, %v982, %v969
        %v985 = vsel %vm513, %v983, %v971
        %vm986 = vcmask 195584
        %v987 = vsel %vm986, %v984, %v977
        %v988 = vsel %vm986, %v985, %v979
        %v989 = vpack.c.bf16 %v988, %v987
        %s990 = smul.addr %s263, 4
        %s991 = scalar_lea.vmem %s2, %s990
        %v992 = vld [vmem:[%s991] sm:$0xf]
        %v993 = vld [vmem:[%s991 + $0x4] sm:$0xf]
        %v994 = vld [vmem:[%s991 + $0x8] sm:$0xf]
        %v995 = vld [vmem:[%s991 + $0xc] sm:$0xf]
        %v996 = vld [vmem:[#allocation2] sm:$0xff]
        %v997 = vld [vmem:[#allocation2 + $0x8] sm:$0xff]
        %v1002 = vunpack.c.l.b16 %v992
        %v1003 = vunpack.c.l.b16 %v993
        %v1004 = vunpack.c.l.b16 %v994
        %v1005 = vunpack.c.l.b16 %v995
        %v1006 = vpack.c.b16 %v1003, %v1002
        %v1007 = vpack.c.b16 %v1005, %v1004
        %vm1010 = vcmask 261120
        %v1012 = vsel %vm1010, %v989, 0
        %1014 = vmatprep.subr.bf16.mxu0 0
        %1015 = vmatpush1.bf16.msra.mxu0 0
        %1016 = vmatprep.subr.bf16.mxu0 0
        %1017 = vmatpush1.bf16.msra.mxu0 0
        %1018 = vmatprep.subr.bf16.mxu0 0
        %1019 = vmatpush1.bf16.msra.mxu0 0
        %1020 = vmatprep.subr.bf16.mxu0 0
        %1021 = vmatpush1.bf16.msra.mxu0 0
        %1022 = vmatprep.subr.bf16.mxu0 0
        %1023 = vmatpush1.bf16.msra.mxu0 0
        %1024 = vmatprep.subr.bf16.mxu0 0
        %1025 = vmatpush1.bf16.msra.mxu0 0
        %1026 = vmatprep.subr.bf16.mxu0 0
        %1027 = vmatpush1.bf16.msra.mxu0 %v1007
        %1028 = vmatprep.subr.bf16.mxu0 0
        %1029 = vmatpush1.bf16.msra.mxu0 %v1006
        %1030 = vmatprep.subr.bf16.mxu0 0
        %1031 = vmatpush2.bf16.msra.mxu0 0
        %1032 = vmatprep.subr.bf16.mxu0 0
        %1033 = vmatpush2.bf16.msra.mxu0 0
        %1034 = vmatprep.subr.bf16.mxu0 0
        %1035 = vmatpush2.bf16.msra.mxu0 0
        %1036 = vmatprep.subr.bf16.mxu0 0
        %1037 = vmatpush2.bf16.msra.mxu0 0
        %1038 = vmatprep.subr.bf16.mxu0 0
        %1039 = vmatpush2.bf16.msra.mxu0 0
        %1040 = vmatprep.subr.bf16.mxu0 0
        %1041 = vmatpush2.bf16.msra.mxu0 0
        %1042 = vmatprep.subr.bf16.mxu0 0
        %1043 = vmatpush2.bf16.msra.mxu0 0
        %1044 = vmatprep.subr.bf16.mxu0 0
        %1045 = vmatpush2.bf16.msra.mxu0 0
        %1046 = vmatprep.mubr.bf16.mxu0 0
        %1047 = vmatmul.mubr.bf16.gmra.mxu0 %v1012
        %v1048 = vpop.f32.mrf.mxu0
        %v1049 = vadd.f32 0.0, %v1048
        %v1050 = vpop.f32.mrf.mxu0
        %v1051 = vpop.f32.mrf.mxu0
        %v1052 = vadd.f32 0.0, %v1051
        %v1053 = vpop.f32.mrf.mxu0
        %1054 = vdwg.mxu0
        %v1055 = vadd.f32 %v996, %v1049
        %v1056 = vadd.f32 %v997, %v1052
        %1057 = vst.msk [vmem:[#allocation2] sm:$0xff] %vm297, %v1055
        %1058 = vst.msk [vmem:[#allocation2 + $0x8] sm:$0xff] %vm297, %v1056
        %p1059 = scmp.eq.s32.totalorder %s28, 1
        // Predicated region
        $region41: #{attention_forward.1} parent=35 // pred_check
          %p1060 = pneg %p1059
        $region42: #{attention_forward.1} parent=35 // pred_check_branch
          %1062 = sbr.rel (%p1060) target = $region44
        $region43: #{attention_forward.1} parent=35 // pred_region
          %v1063 = vld [vmem:[#allocation2] sm:$0xff]
          %v1064 = vld [vmem:[#allocation2 + $0x8] sm:$0xff]
          %v1065 = vld [vmem:[%s3] sm:$0x1]
          %v1067 = vlaneseq
          %v1068 = vshrl.u32 %v1067, 7
          %v1069 = vsub.s32 0, %v1068
          %v1070 = vrot.slane %v1065, %v1069
          %v1072 = vadd.f32 %v1063, %v1070
          %v1073 = vadd.f32 %v1064, %v1070
          %1074 = vst.msk [vmem:[%s235] sm:$0xff] %vm297, %v1072
          %1075 = vst.msk [vmem:[%s235 + $0x8] sm:$0xff] %vm297, %v1073
        $region44: #{attention_forward.1} parent=35 // pred_fallthru
          _
        %s1076 = sand.u32 %s132, 1
        %s1077 = scalar_lea.sflag [#allocation4], %s1076
        %s1078 = sand.u32 %s132, 1
        %s1079 = smul.addr %s1078, 16
        %s1080 = scalar_lea.vmem [#allocation3], %s1079
        %s1081 = sand.u32 %s160, 1
        %s1082 = scalar_lea.sflag [#allocation6], %s1081
        %s1083 = sand.u32 %s160, 1
        %s1084 = smul.addr %s1083, 64
        %s1085 = scalar_lea.vmem [#allocation5], %s1084
        // Predicated region
        $region45: #{attention_forward.1} parent=35 // pred_check
          %p1086 = pneg %p142
        $region46: #{attention_forward.1} parent=35 // pred_check_branch
          %1088 = sbr.rel (%p1086) target = $region48
        $region47: #{attention_forward.1} parent=35 // pred_region
          %s1090 = ssub.s32 256, 256
          %1091 = vsyncadd %s1077, %s1090
          %s1092 = smul.addr %s27, 2
          %s1093 = smul.addr %s1092, 128
          %s1094 = scalar_lea.hbm %s4, %s1093
          %s1095 = sshll.u32 %s1080, 4
          %s1096 = int_to_ptr.vmem [resolvable:$true] %s1095
          %1101 = dma.vmem_to_hbm [thread:$0]  %s1096, 256, %s1094, %s1077, 128, 128, 8
        $region48: #{attention_forward.1} parent=35 // pred_fallthru
          _
        // Predicated region
        $region49: #{attention_forward.1} parent=35 // pred_check
          %p1102 = pneg %p170
        $region50: #{attention_forward.1} parent=35 // pred_check_branch
          %1104 = sbr.rel (%p1102) target = $region52
        $region51: #{attention_forward.1} parent=35 // pred_region
          %s1105 = smul.u32 4, %s28
          %s1107 = ssub.s32 1024, 1024
          %1108 = vsyncadd %s1082, %s1107
          %s1109 = smul.addr %s1105, 2
          %s1110 = smul.addr %s27, 16
          %s1111 = sadd.s32 %s1109, %s1110
          %s1112 = smul.addr %s1111, 128
          %s1113 = scalar_lea.hbm %s5, %s1112
          %s1114 = sshll.u32 %s1085, 4
          %s1115 = int_to_ptr.vmem [resolvable:$true] %s1114
          %1120 = dma.vmem_to_hbm [thread:$0]  %s1115, 1024, %s1113, %s1082, 128, 128, 8
        $region52: #{attention_forward.1} parent=35 // pred_fallthru
          _
      $region36: #{attention_forward.1} parent=5 // pred_fallthru
        _
      %p1121 = scmp.le.s32.totalorder 2, %s18
      // Predicated region
      $region53: #{attention_forward.1} parent=5 // pred_check
        %p1122 = pneg %p1121
      $region54: #{attention_forward.1} parent=5 // pred_check_branch
        %1124 = sbr.rel (%p1122) target = $region56
      $region55: #{attention_forward.1} parent=5 // pred_region
        %s1125 = ssub.s32 %s18, 2
        // Predicated region
        $region57: #{attention_forward.1} parent=55 // pred_check
          %p1126 = pneg %p148
        $region58: #{attention_forward.1} parent=55 // pred_check_branch
          %1128 = sbr.rel (%p1126) target = $region60
        $region59: #{attention_forward.1} parent=55 // pred_region
          %s1129 = sand.u32 %s133, 1
          %s1130 = scalar_lea.sflag [#allocation4], %s1129
          %s1131 = sand.u32 %s133, 1
          %s1132 = smul.addr %s1131, 16
          %s1133 = scalar_lea.vmem [#allocation3], %s1132
          %1134 = dma.done %s1130, 256
        $region60: #{attention_forward.1} parent=55 // pred_fallthru
          _
        // Predicated region
        $region61: #{attention_forward.1} parent=55 // pred_check
          %p1135 = pneg %p176
        $region62: #{attention_forward.1} parent=55 // pred_check_branch
          %1137 = sbr.rel (%p1135) target = $region64
        $region63: #{attention_forward.1} parent=55 // pred_region
          %s1138 = sand.u32 %s161, 1
          %s1139 = scalar_lea.sflag [#allocation6], %s1138
          %s1140 = sand.u32 %s161, 1
          %s1141 = smul.addr %s1140, 64
          %s1142 = scalar_lea.vmem [#allocation5], %s1141
          %1143 = dma.done %s1139, 1024
        $region64: #{attention_forward.1} parent=55 // pred_fallthru
          _
      $region56: #{attention_forward.1} parent=5 // pred_fallthru
        _
    $region6: #{attention_forward.1} parent=1 // loop_footer
      %s22 = sadd.s32 1, %s18
    $region7: #{attention_forward.1} parent=1 // loop_footer_branch
      %17 = sbr.rel target = $region3
    $region8: #{attention_forward.1} parent=1 // loop_exit
      _
    %1144 = vsyncpa [#allocation4], 1
    %s1145 = scalar_lea.sflag [#allocation4], 1
    %1146 = vsyncpa %s1145, 1
    %1147 = vsyncpa [#allocation6], 1
    %s1148 = scalar_lea.sflag [#allocation6], 1
    %1149 = vsyncpa %s1148, 1

</llo_original>
